<compile_context>
chip_gen: v7x
topology: tpu7x:2x2x1
jax: 0.10.0
libtpu: 0.0.40
codegen_flags: <defaults>
</compile_context>

<pallas_src>
import functools

import jax
import jax.numpy as jnp
from jax.experimental import pallas as pl
from jax.experimental.pallas import tpu as pltpu

_LANE = 128


def _round_up(x, m):
    return ((x + m - 1) // m) * m


def _sublane_quantum(itemsize):
    # Sublane rows per 32-bit packed group: 8 for f32, 16 for bf16, 32 for int8.
    return max(8, 32 // itemsize)


def _block_bytes(shape, itemsize):
    """VMEM bytes of a block, including (sublane, 128-lane) padding of the two minor dims."""
    q = _sublane_quantum(itemsize)
    lead = 1
    for d in shape[:-2]:
        lead *= d
    sub = _round_up(shape[-2], q)
    lane = _round_up(shape[-1], _LANE)
    return lead * sub * lane * itemsize


def _vmem_budgets():
    """Per-generation (pipelined-footprint budget, vmem_limit_bytes)."""
    try:
        vmem_cap = int(pltpu.get_tpu_info().vmem_capacity_bytes)
    except Exception:
        vmem_cap = 64 * 1024 * 1024  # conservative fallback = v7x per-core VMEM
    # v5e/v6e (128 MiB physical): ~56 MiB pipelined footprint, 100 MiB scoped limit.
    # v7x     (64 MiB physical):  ~40 MiB pipelined footprint,  56 MiB scoped limit.
    budget = min(56 * 1024 * 1024, vmem_cap * 5 // 8)
    vmem_limit = min(100 * 1024 * 1024, vmem_cap * 7 // 8)
    return budget, vmem_limit


def _pick_tile_ho(Ho, Wo, C, S, W, itemsize, budget, n_batch):
    """Largest sublane-aligned divisor of Ho whose *padded* pipelined VMEM footprint
    fits `budget`, preferring tiles that leave enough grid steps for pipelining
    and megacore/2-TC sharding."""
    q = _sublane_quantum(itemsize)

    def footprint(tho):
        in_blk = _block_bytes((C, tho * S, W), itemsize)         # double-buffered
        out_blk = _block_bytes((C * S * S, tho, Wo), itemsize)   # double-buffered
        tbuf = _block_bytes((C, W, tho * S), itemsize)           # scratch
        bbuf = _block_bytes((C, tho * S, Wo), itemsize)          # scratch
        return 2 * in_blk + 2 * out_blk + tbuf + bbuf

    def aligned(tho):
        # Second-minor block dims (THo*S for input, THo for output) must be
        # sublane-aligned or span the full array dim (the lane dims W / Wo are
        # always full, so they are always legal).
        return tho == Ho or (tho % q == 0 and (tho * S) % q == 0)

    cands = [d for d in range(Ho, 0, -1) if Ho % d == 0 and aligned(d)]
    fitting = [d for d in cands if footprint(d) <= budget] or [cands[-1]]
    # TODO(synk): if even the smallest aligned Ho-tile exceeds the budget (very
    # large C*W), split the W or C dimension instead of Ho.

    # Aim for >= ~4 total grid steps (and >=2 along the Ho axis when N is small)
    # so prefetch/writeback overlap and both v7x TensorCores get work.
    min_h_steps = max(1, -(-4 // max(1, n_batch)))
    preferred = [d for d in fitting if Ho // d >= min_h_steps]
    return preferred[0] if preferred else fitting[0]


def _pixel_unshuffle_kernel(S, C, THo, Wo, x_ref, o_ref, tbuf, bbuf):
    # x_ref : (C, THo*S, W)      input H-rows for this Ho-tile, lane dim = W (dense DMA)
    # o_ref : (C*S*S, THo, Wo)   all output channels for this Ho-tile
    # tbuf  : (C, W, THo*S)      input block with W re-homed to the sublane axis
    # bbuf  : (C, THo*S, Wo)     per-s2 slab, back-transposed, for sublane s1 picks
    #
    # One large forward transpose (hoisted out of the s1/s2 loops): W -> sublane axis,
    # so both phase selections become native sublane-strided reads.
    tbuf[...] = jnp.swapaxes(x_ref[...], 1, 2)                # (C, W, THo*S)
    for s2 in range(S):
        # w = wo*S + s2: sublane-strided pick, then one back-transpose per s2.
        sl = tbuf[:, pl.ds(s2, Wo, stride=S), :]              # (C, Wo, THo*S)
        bbuf[...] = jnp.swapaxes(sl, 1, 2)                    # (C, THo*S, Wo)
        for s1 in range(S):
            # h = t*S + s1: sublane-strided pick straight into the store.
            res = bbuf[:, pl.ds(s1, THo, stride=S), :]        # (C, THo, Wo)
            base = (s1 * S + s2) * C                          # PyTorch (s1, s2, c) channel order
            o_ref[base:base + C, :, :] = res
    # TODO(synk): for large C / very large tiles, chunk this work over C with
    # lax.fori_loop(..., unroll=True) to bound live vreg slab sizes; for bf16/int8
    # inputs an MXU one-hot lane permute (plus a lane-dense flat output block) could
    # replace the XLU transposes — not done here because it is not bit-exact for f32.


def pixel_unshuffle(x, scale=4):
    """Pallas TPU PixelUnshuffle: (N, C, H, W) -> (N, C*S*S, H//S, W//S)."""
    N, C, H, W = x.shape
    S = scale
    assert H % S == 0 and W % S == 0
    Ho, Wo = H // S, W // S
    itemsize = x.dtype.itemsize

    budget, vmem_limit = _vmem_budgets()
    THo = _pick_tile_ho(Ho, Wo, C, S, W, itemsize, budget, N)

    out = pl.pallas_call(
        functools.partial(_pixel_unshuffle_kernel, S, C, THo, Wo),
        out_shape=jax.ShapeDtypeStruct((N, C * S * S, Ho, Wo), x.dtype),
        grid=(N, Ho // THo),
        in_specs=[
            # (THo*S) consecutive H rows, full W: contiguous W-wide DMA rows.
            pl.BlockSpec((None, C, THo * S, W), lambda n, hb: (n, 0, hb, 0)),
        ],
        # All S*S*C output channels for this Ho tile, full Wo.
        out_specs=pl.BlockSpec((None, C * S * S, THo, Wo), lambda n, hb: (n, 0, hb, 0)),
        scratch_shapes=[
            pltpu.VMEM((C, W, THo * S), x.dtype),
            pltpu.VMEM((C, THo * S, Wo), x.dtype),
        ],
        compiler_params=pltpu.CompilerParams(
            dimension_semantics=("parallel", "parallel"),
            vmem_limit_bytes=vmem_limit,
        ),
        cost_estimate=pl.CostEstimate(
            flops=0,
            transcendentals=0,
            bytes_accessed=2 * N * C * H * W * itemsize,
        ),
    )(x)
    return out


def pixel_unshuffle_ref(x, scale=4):
    """Pure-JAX reference reproducing the PyTorch forward exactly."""
    N, C, H, W = x.shape
    S = scale
    x = x.reshape(N, C, H // S, S, W // S, S)
    x = jnp.transpose(x, (0, 3, 5, 1, 2, 4))
    return x.reshape(N, C * S * S, H // S, W // S)


if __name__ == "__main__":
    key = jax.random.PRNGKey(0)
    x = jax.random.normal(key, (2, 4, 16, 16), dtype=jnp.float32)  # NCHW

    fn = jax.jit(pixel_unshuffle, static_argnames="scale")
    out = jax.block_until_ready(fn(x, scale=4))

    ref = pixel_unshuffle_ref(x, scale=4)
    assert out.shape == (2, 4 * 4 * 4, 4, 4), out.shape
    assert out.dtype == x.dtype
    assert jnp.array_equal(out, ref), "mismatch vs pure-JAX reference"

    print("KERNEL_OK")
</pallas_src>

<mosaic_0001>
module attributes {stable_mosaic.version = 11 : i64} {
  func.func @_pixel_unshuffle_kernel(%arg0: i32, %arg1: i32, %arg2: memref<1x4x16x16xf32, #tpu.memory_space<vmem>>, %arg3: memref<1x64x4x4xf32, #tpu.memory_space<vmem>>, %arg4: memref<4x16x16xf32, #tpu.memory_space<vmem>>, %arg5: memref<4x16x4xf32, #tpu.memory_space<vmem>>) attributes {dimension_semantics = [#tpu.dimension_semantics<parallel>, #tpu.dimension_semantics<parallel>], iteration_bounds = array<i64: 2, 1>, scalar_prefetch = 0 : i64, scratch_operands = 2 : i64, tpu.core_type = #tpu.core_type<tc>, window_params = [{transform_indices = @transform_0, window_bounds = array<i64: 1, 4, 16, 16>}, {transform_indices = @transform_1, window_bounds = array<i64: 1, 64, 4, 4>}]} {
    %c0 = arith.constant 0 : index
    %c0_0 = arith.constant 0 : index
    %c0_1 = arith.constant 0 : index
    %c0_2 = arith.constant 0 : index
    %0 = vector.load %arg2[%c0, %c0_0, %c0_1, %c0_2] : memref<1x4x16x16xf32, #tpu.memory_space<vmem>>, vector<1x4x16x16xf32>
    %1 = vector.shape_cast %0 : vector<1x4x16x16xf32> to vector<4x16x16xf32>
    %2 = tpu.transpose %1, [0, 2, 1] : vector<4x16x16xf32> -> vector<4x16x16xf32>
    %c0_3 = arith.constant 0 : index
    %c0_4 = arith.constant 0 : index
    %c0_5 = arith.constant 0 : index
    %3 = vector.load %arg4[%c0_3, %c0_4, %c0_5] : memref<4x16x16xf32, #tpu.memory_space<vmem>>, vector<4x16x16xf32>
    tpu.vector_store %arg4[%c0_3, %c0_4, %c0_5], %2 {strides = array<i32>} : memref<4x16x16xf32, #tpu.memory_space<vmem>>, vector<4x16x16xf32>,
    %c0_6 = arith.constant 0 : index
    %c0_7 = arith.constant 0 : index
    %c0_8 = arith.constant 0 : index
    %4 = tpu.strided_load %arg4[%c0_6, %c0_7, %c0_8] {strides = array<i32: 1, 4, 1>} : memref<4x16x16xf32, #tpu.memory_space<vmem>>, vector<4x4x16xf32>
    %5 = tpu.transpose %4, [0, 2, 1] : vector<4x4x16xf32> -> vector<4x16x4xf32>
    %c0_9 = arith.constant 0 : index
    %c0_10 = arith.constant 0 : index
    %c0_11 = arith.constant 0 : index
    %6 = vector.load %arg5[%c0_9, %c0_10, %c0_11] : memref<4x16x4xf32, #tpu.memory_space<vmem>>, vector<4x16x4xf32>
    tpu.vector_store %arg5[%c0_9, %c0_10, %c0_11], %5 {strides = array<i32>} : memref<4x16x4xf32, #tpu.memory_space<vmem>>, vector<4x16x4xf32>,
    %c0_12 = arith.constant 0 : index
    %c0_13 = arith.constant 0 : index
    %c0_14 = arith.constant 0 : index
    %7 = tpu.strided_load %arg5[%c0_12, %c0_13, %c0_14] {strides = array<i32: 1, 4, 1>} : memref<4x16x4xf32, #tpu.memory_space<vmem>>, vector<4x4x4xf32>
    %c0_15 = arith.constant 0 : index
    %c0_16 = arith.constant 0 : index
    %c0_17 = arith.constant 0 : index
    %c0_18 = arith.constant 0 : index
    %8 = vector.load %arg3[%c0_15, %c0_16, %c0_17, %c0_18] : memref<1x64x4x4xf32, #tpu.memory_space<vmem>>, vector<1x4x4x4xf32>
    %9 = vector.shape_cast %8 : vector<1x4x4x4xf32> to vector<4x4x4xf32>
    %10 = vector.shape_cast %7 : vector<4x4x4xf32> to vector<1x4x4x4xf32>
    tpu.vector_store %arg3[%c0_15, %c0_16, %c0_17, %c0_18], %10 {strides = array<i32>} : memref<1x64x4x4xf32, #tpu.memory_space<vmem>>, vector<1x4x4x4xf32>,
    %c0_19 = arith.constant 0 : index
    %c1 = arith.constant 1 : index
    %c0_20 = arith.constant 0 : index
    %11 = tpu.strided_load %arg5[%c0_19, %c1, %c0_20] {strides = array<i32: 1, 4, 1>} : memref<4x16x4xf32, #tpu.memory_space<vmem>>, vector<4x4x4xf32>
    %c0_21 = arith.constant 0 : index
    %c16 = arith.constant 16 : index
    %c0_22 = arith.constant 0 : index
    %c0_23 = arith.constant 0 : index
    %12 = vector.load %arg3[%c0_21, %c16, %c0_22, %c0_23] : memref<1x64x4x4xf32, #tpu.memory_space<vmem>>, vector<1x4x4x4xf32>
    %13 = vector.shape_cast %12 : vector<1x4x4x4xf32> to vector<4x4x4xf32>
    %14 = vector.shape_cast %11 : vector<4x4x4xf32> to vector<1x4x4x4xf32>
    tpu.vector_store %arg3[%c0_21, %c16, %c0_22, %c0_23], %14 {strides = array<i32>} : memref<1x64x4x4xf32, #tpu.memory_space<vmem>>, vector<1x4x4x4xf32>,
    %c0_24 = arith.constant 0 : index
    %c2 = arith.constant 2 : index
    %c0_25 = arith.constant 0 : index
    %15 = tpu.strided_load %arg5[%c0_24, %c2, %c0_25] {strides = array<i32: 1, 4, 1>} : memref<4x16x4xf32, #tpu.memory_space<vmem>>, vector<4x4x4xf32>
    %c0_26 = arith.constant 0 : index
    %c32 = arith.constant 32 : index
    %c0_27 = arith.constant 0 : index
    %c0_28 = arith.constant 0 : index
    %16 = vector.load %arg3[%c0_26, %c32, %c0_27, %c0_28] : memref<1x64x4x4xf32, #tpu.memory_space<vmem>>, vector<1x4x4x4xf32>
    %17 = vector.shape_cast %16 : vector<1x4x4x4xf32> to vector<4x4x4xf32>
    %18 = vector.shape_cast %15 : vector<4x4x4xf32> to vector<1x4x4x4xf32>
    tpu.vector_store %arg3[%c0_26, %c32, %c0_27, %c0_28], %18 {strides = array<i32>} : memref<1x64x4x4xf32, #tpu.memory_space<vmem>>, vector<1x4x4x4xf32>,
    %c0_29 = arith.constant 0 : index
    %c3 = arith.constant 3 : index
    %c0_30 = arith.constant 0 : index
    %19 = tpu.strided_load %arg5[%c0_29, %c3, %c0_30] {strides = array<i32: 1, 4, 1>} : memref<4x16x4xf32, #tpu.memory_space<vmem>>, vector<4x4x4xf32>
    %c0_31 = arith.constant 0 : index
    %c48 = arith.constant 48 : index
    %c0_32 = arith.constant 0 : index
    %c0_33 = arith.constant 0 : index
    %20 = vector.load %arg3[%c0_31, %c48, %c0_32, %c0_33] : memref<1x64x4x4xf32, #tpu.memory_space<vmem>>, vector<1x4x4x4xf32>
    %21 = vector.shape_cast %20 : vector<1x4x4x4xf32> to vector<4x4x4xf32>
    %22 = vector.shape_cast %19 : vector<4x4x4xf32> to vector<1x4x4x4xf32>
    tpu.vector_store %arg3[%c0_31, %c48, %c0_32, %c0_33], %22 {strides = array<i32>} : memref<1x64x4x4xf32, #tpu.memory_space<vmem>>, vector<1x4x4x4xf32>,
    %c0_34 = arith.constant 0 : index
    %c1_35 = arith.constant 1 : index
    %c0_36 = arith.constant 0 : index
    %23 = tpu.strided_load %arg4[%c0_34, %c1_35, %c0_36] {strides = array<i32: 1, 4, 1>} : memref<4x16x16xf32, #tpu.memory_space<vmem>>, vector<4x4x16xf32>
    %24 = tpu.transpose %23, [0, 2, 1] : vector<4x4x16xf32> -> vector<4x16x4xf32>
    %c0_37 = arith.constant 0 : index
    %c0_38 = arith.constant 0 : index
    %c0_39 = arith.constant 0 : index
    %25 = vector.load %arg5[%c0_37, %c0_38, %c0_39] : memref<4x16x4xf32, #tpu.memory_space<vmem>>, vector<4x16x4xf32>
    tpu.vector_store %arg5[%c0_37, %c0_38, %c0_39], %24 {strides = array<i32>} : memref<4x16x4xf32, #tpu.memory_space<vmem>>, vector<4x16x4xf32>,
    %c0_40 = arith.constant 0 : index
    %c0_41 = arith.constant 0 : index
    %c0_42 = arith.constant 0 : index
    %26 = tpu.strided_load %arg5[%c0_40, %c0_41, %c0_42] {strides = array<i32: 1, 4, 1>} : memref<4x16x4xf32, #tpu.memory_space<vmem>>, vector<4x4x4xf32>
    %c0_43 = arith.constant 0 : index
    %c4 = arith.constant 4 : index
    %c0_44 = arith.constant 0 : index
    %c0_45 = arith.constant 0 : index
    %27 = vector.load %arg3[%c0_43, %c4, %c0_44, %c0_45] : memref<1x64x4x4xf32, #tpu.memory_space<vmem>>, vector<1x4x4x4xf32>
    %28 = vector.shape_cast %27 : vector<1x4x4x4xf32> to vector<4x4x4xf32>
    %29 = vector.shape_cast %26 : vector<4x4x4xf32> to vector<1x4x4x4xf32>
    tpu.vector_store %arg3[%c0_43, %c4, %c0_44, %c0_45], %29 {strides = array<i32>} : memref<1x64x4x4xf32, #tpu.memory_space<vmem>>, vector<1x4x4x4xf32>,
    %c0_46 = arith.constant 0 : index
    %c1_47 = arith.constant 1 : index
    %c0_48 = arith.constant 0 : index
    %30 = tpu.strided_load %arg5[%c0_46, %c1_47, %c0_48] {strides = array<i32: 1, 4, 1>} : memref<4x16x4xf32, #tpu.memory_space<vmem>>, vector<4x4x4xf32>
    %c0_49 = arith.constant 0 : index
    %c20 = arith.constant 20 : index
    %c0_50 = arith.constant 0 : index
    %c0_51 = arith.constant 0 : index
    %31 = vector.load %arg3[%c0_49, %c20, %c0_50, %c0_51] : memref<1x64x4x4xf32, #tpu.memory_space<vmem>>, vector<1x4x4x4xf32>
    %32 = vector.shape_cast %31 : vector<1x4x4x4xf32> to vector<4x4x4xf32>
    %33 = vector.shape_cast %30 : vector<4x4x4xf32> to vector<1x4x4x4xf32>
    tpu.vector_store %arg3[%c0_49, %c20, %c0_50, %c0_51], %33 {strides = array<i32>} : memref<1x64x4x4xf32, #tpu.memory_space<vmem>>, vector<1x4x4x4xf32>,
    %c0_52 = arith.constant 0 : index
    %c2_53 = arith.constant 2 : index
    %c0_54 = arith.constant 0 : index
    %34 = tpu.strided_load %arg5[%c0_52, %c2_53, %c0_54] {strides = array<i32: 1, 4, 1>} : memref<4x16x4xf32, #tpu.memory_space<vmem>>, vector<4x4x4xf32>
    %c0_55 = arith.constant 0 : index
    %c36 = arith.constant 36 : index
    %c0_56 = arith.constant 0 : index
    %c0_57 = arith.constant 0 : index
    %35 = vector.load %arg3[%c0_55, %c36, %c0_56, %c0_57] : memref<1x64x4x4xf32, #tpu.memory_space<vmem>>, vector<1x4x4x4xf32>
    %36 = vector.shape_cast %35 : vector<1x4x4x4xf32> to vector<4x4x4xf32>
    %37 = vector.shape_cast %34 : vector<4x4x4xf32> to vector<1x4x4x4xf32>
    tpu.vector_store %arg3[%c0_55, %c36, %c0_56, %c0_57], %37 {strides = array<i32>} : memref<1x64x4x4xf32, #tpu.memory_space<vmem>>, vector<1x4x4x4xf32>,
    %c0_58 = arith.constant 0 : index
    %c3_59 = arith.constant 3 : index
    %c0_60 = arith.constant 0 : index
    %38 = tpu.strided_load %arg5[%c0_58, %c3_59, %c0_60] {strides = array<i32: 1, 4, 1>} : memref<4x16x4xf32, #tpu.memory_space<vmem>>, vector<4x4x4xf32>
    %c0_61 = arith.constant 0 : index
    %c52 = arith.constant 52 : index
    %c0_62 = arith.constant 0 : index
    %c0_63 = arith.constant 0 : index
    %39 = vector.load %arg3[%c0_61, %c52, %c0_62, %c0_63] : memref<1x64x4x4xf32, #tpu.memory_space<vmem>>, vector<1x4x4x4xf32>
    %40 = vector.shape_cast %39 : vector<1x4x4x4xf32> to vector<4x4x4xf32>
    %41 = vector.shape_cast %38 : vector<4x4x4xf32> to vector<1x4x4x4xf32>
    tpu.vector_store %arg3[%c0_61, %c52, %c0_62, %c0_63], %41 {strides = array<i32>} : memref<1x64x4x4xf32, #tpu.memory_space<vmem>>, vector<1x4x4x4xf32>,
    %c0_64 = arith.constant 0 : index
    %c2_65 = arith.constant 2 : index
    %c0_66 = arith.constant 0 : index
    %42 = tpu.strided_load %arg4[%c0_64, %c2_65, %c0_66] {strides = array<i32: 1, 4, 1>} : memref<4x16x16xf32, #tpu.memory_space<vmem>>, vector<4x4x16xf32>
    %43 = tpu.transpose %42, [0, 2, 1] : vector<4x4x16xf32> -> vector<4x16x4xf32>
    %c0_67 = arith.constant 0 : index
    %c0_68 = arith.constant 0 : index
    %c0_69 = arith.constant 0 : index
    %44 = vector.load %arg5[%c0_67, %c0_68, %c0_69] : memref<4x16x4xf32, #tpu.memory_space<vmem>>, vector<4x16x4xf32>
    tpu.vector_store %arg5[%c0_67, %c0_68, %c0_69], %43 {strides = array<i32>} : memref<4x16x4xf32, #tpu.memory_space<vmem>>, vector<4x16x4xf32>,
    %c0_70 = arith.constant 0 : index
    %c0_71 = arith.constant 0 : index
    %c0_72 = arith.constant 0 : index
    %45 = tpu.strided_load %arg5[%c0_70, %c0_71, %c0_72] {strides = array<i32: 1, 4, 1>} : memref<4x16x4xf32, #tpu.memory_space<vmem>>, vector<4x4x4xf32>
    %c0_73 = arith.constant 0 : index
    %c8 = arith.constant 8 : index
    %c0_74 = arith.constant 0 : index
    %c0_75 = arith.constant 0 : index
    %46 = vector.load %arg3[%c0_73, %c8, %c0_74, %c0_75] : memref<1x64x4x4xf32, #tpu.memory_space<vmem>>, vector<1x4x4x4xf32>
    %47 = vector.shape_cast %46 : vector<1x4x4x4xf32> to vector<4x4x4xf32>
    %48 = vector.shape_cast %45 : vector<4x4x4xf32> to vector<1x4x4x4xf32>
    tpu.vector_store %arg3[%c0_73, %c8, %c0_74, %c0_75], %48 {strides = array<i32>} : memref<1x64x4x4xf32, #tpu.memory_space<vmem>>, vector<1x4x4x4xf32>,
    %c0_76 = arith.constant 0 : index
    %c1_77 = arith.constant 1 : index
    %c0_78 = arith.constant 0 : index
    %49 = tpu.strided_load %arg5[%c0_76, %c1_77, %c0_78] {strides = array<i32: 1, 4, 1>} : memref<4x16x4xf32, #tpu.memory_space<vmem>>, vector<4x4x4xf32>
    %c0_79 = arith.constant 0 : index
    %c24 = arith.constant 24 : index
    %c0_80 = arith.constant 0 : index
    %c0_81 = arith.constant 0 : index
    %50 = vector.load %arg3[%c0_79, %c24, %c0_80, %c0_81] : memref<1x64x4x4xf32, #tpu.memory_space<vmem>>, vector<1x4x4x4xf32>
    %51 = vector.shape_cast %50 : vector<1x4x4x4xf32> to vector<4x4x4xf32>
    %52 = vector.shape_cast %49 : vector<4x4x4xf32> to vector<1x4x4x4xf32>
    tpu.vector_store %arg3[%c0_79, %c24, %c0_80, %c0_81], %52 {strides = array<i32>} : memref<1x64x4x4xf32, #tpu.memory_space<vmem>>, vector<1x4x4x4xf32>,
    %c0_82 = arith.constant 0 : index
    %c2_83 = arith.constant 2 : index
    %c0_84 = arith.constant 0 : index
    %53 = tpu.strided_load %arg5[%c0_82, %c2_83, %c0_84] {strides = array<i32: 1, 4, 1>} : memref<4x16x4xf32, #tpu.memory_space<vmem>>, vector<4x4x4xf32>
    %c0_85 = arith.constant 0 : index
    %c40 = arith.constant 40 : index
    %c0_86 = arith.constant 0 : index
    %c0_87 = arith.constant 0 : index
    %54 = vector.load %arg3[%c0_85, %c40, %c0_86, %c0_87] : memref<1x64x4x4xf32, #tpu.memory_space<vmem>>, vector<1x4x4x4xf32>
    %55 = vector.shape_cast %54 : vector<1x4x4x4xf32> to vector<4x4x4xf32>
    %56 = vector.shape_cast %53 : vector<4x4x4xf32> to vector<1x4x4x4xf32>
    tpu.vector_store %arg3[%c0_85, %c40, %c0_86, %c0_87], %56 {strides = array<i32>} : memref<1x64x4x4xf32, #tpu.memory_space<vmem>>, vector<1x4x4x4xf32>,
    %c0_88 = arith.constant 0 : index
    %c3_89 = arith.constant 3 : index
    %c0_90 = arith.constant 0 : index
    %57 = tpu.strided_load %arg5[%c0_88, %c3_89, %c0_90] {strides = array<i32: 1, 4, 1>} : memref<4x16x4xf32, #tpu.memory_space<vmem>>, vector<4x4x4xf32>
    %c0_91 = arith.constant 0 : index
    %c56 = arith.constant 56 : index
    %c0_92 = arith.constant 0 : index
    %c0_93 = arith.constant 0 : index
    %58 = vector.load %arg3[%c0_91, %c56, %c0_92, %c0_93] : memref<1x64x4x4xf32, #tpu.memory_space<vmem>>, vector<1x4x4x4xf32>
    %59 = vector.shape_cast %58 : vector<1x4x4x4xf32> to vector<4x4x4xf32>
    %60 = vector.shape_cast %57 : vector<4x4x4xf32> to vector<1x4x4x4xf32>
    tpu.vector_store %arg3[%c0_91, %c56, %c0_92, %c0_93], %60 {strides = array<i32>} : memref<1x64x4x4xf32, #tpu.memory_space<vmem>>, vector<1x4x4x4xf32>,
    %c0_94 = arith.constant 0 : index
    %c3_95 = arith.constant 3 : index
    %c0_96 = arith.constant 0 : index
    %61 = tpu.strided_load %arg4[%c0_94, %c3_95, %c0_96] {strides = array<i32: 1, 4, 1>} : memref<4x16x16xf32, #tpu.memory_space<vmem>>, vector<4x4x16xf32>
    %62 = tpu.transpose %61, [0, 2, 1] : vector<4x4x16xf32> -> vector<4x16x4xf32>
    %c0_97 = arith.constant 0 : index
    %c0_98 = arith.constant 0 : index
    %c0_99 = arith.constant 0 : index
    %63 = vector.load %arg5[%c0_97, %c0_98, %c0_99] : memref<4x16x4xf32, #tpu.memory_space<vmem>>, vector<4x16x4xf32>
    tpu.vector_store %arg5[%c0_97, %c0_98, %c0_99], %62 {strides = array<i32>} : memref<4x16x4xf32, #tpu.memory_space<vmem>>, vector<4x16x4xf32>,
    %c0_100 = arith.constant 0 : index
    %c0_101 = arith.constant 0 : index
    %c0_102 = arith.constant 0 : index
    %64 = tpu.strided_load %arg5[%c0_100, %c0_101, %c0_102] {strides = array<i32: 1, 4, 1>} : memref<4x16x4xf32, #tpu.memory_space<vmem>>, vector<4x4x4xf32>
    %c0_103 = arith.constant 0 : index
    %c12 = arith.constant 12 : index
    %c0_104 = arith.constant 0 : index
    %c0_105 = arith.constant 0 : index
    %65 = vector.load %arg3[%c0_103, %c12, %c0_104, %c0_105] : memref<1x64x4x4xf32, #tpu.memory_space<vmem>>, vector<1x4x4x4xf32>
    %66 = vector.shape_cast %65 : vector<1x4x4x4xf32> to vector<4x4x4xf32>
    %67 = vector.shape_cast %64 : vector<4x4x4xf32> to vector<1x4x4x4xf32>
    tpu.vector_store %arg3[%c0_103, %c12, %c0_104, %c0_105], %67 {strides = array<i32>} : memref<1x64x4x4xf32, #tpu.memory_space<vmem>>, vector<1x4x4x4xf32>,
    %c0_106 = arith.constant 0 : index
    %c1_107 = arith.constant 1 : index
    %c0_108 = arith.constant 0 : index
    %68 = tpu.strided_load %arg5[%c0_106, %c1_107, %c0_108] {strides = array<i32: 1, 4, 1>} : memref<4x16x4xf32, #tpu.memory_space<vmem>>, vector<4x4x4xf32>
    %c0_109 = arith.constant 0 : index
    %c28 = arith.constant 28 : index
    %c0_110 = arith.constant 0 : index
    %c0_111 = arith.constant 0 : index
    %69 = vector.load %arg3[%c0_109, %c28, %c0_110, %c0_111] : memref<1x64x4x4xf32, #tpu.memory_space<vmem>>, vector<1x4x4x4xf32>
    %70 = vector.shape_cast %69 : vector<1x4x4x4xf32> to vector<4x4x4xf32>
    %71 = vector.shape_cast %68 : vector<4x4x4xf32> to vector<1x4x4x4xf32>
    tpu.vector_store %arg3[%c0_109, %c28, %c0_110, %c0_111], %71 {strides = array<i32>} : memref<1x64x4x4xf32, #tpu.memory_space<vmem>>, vector<1x4x4x4xf32>,
    %c0_112 = arith.constant 0 : index
    %c2_113 = arith.constant 2 : index
    %c0_114 = arith.constant 0 : index
    %72 = tpu.strided_load %arg5[%c0_112, %c2_113, %c0_114] {strides = array<i32: 1, 4, 1>} : memref<4x16x4xf32, #tpu.memory_space<vmem>>, vector<4x4x4xf32>
    %c0_115 = arith.constant 0 : index
    %c44 = arith.constant 44 : index
    %c0_116 = arith.constant 0 : index
    %c0_117 = arith.constant 0 : index
    %73 = vector.load %arg3[%c0_115, %c44, %c0_116, %c0_117] : memref<1x64x4x4xf32, #tpu.memory_space<vmem>>, vector<1x4x4x4xf32>
    %74 = vector.shape_cast %73 : vector<1x4x4x4xf32> to vector<4x4x4xf32>
    %75 = vector.shape_cast %72 : vector<4x4x4xf32> to vector<1x4x4x4xf32>
    tpu.vector_store %arg3[%c0_115, %c44, %c0_116, %c0_117], %75 {strides = array<i32>} : memref<1x64x4x4xf32, #tpu.memory_space<vmem>>, vector<1x4x4x4xf32>,
    %c0_118 = arith.constant 0 : index
    %c3_119 = arith.constant 3 : index
    %c0_120 = arith.constant 0 : index
    %76 = tpu.strided_load %arg5[%c0_118, %c3_119, %c0_120] {strides = array<i32: 1, 4, 1>} : memref<4x16x4xf32, #tpu.memory_space<vmem>>, vector<4x4x4xf32>
    %c0_121 = arith.constant 0 : index
    %c60 = arith.constant 60 : index
    %c0_122 = arith.constant 0 : index
    %c0_123 = arith.constant 0 : index
    %77 = vector.load %arg3[%c0_121, %c60, %c0_122, %c0_123] : memref<1x64x4x4xf32, #tpu.memory_space<vmem>>, vector<1x4x4x4xf32>
    %78 = vector.shape_cast %77 : vector<1x4x4x4xf32> to vector<4x4x4xf32>
    %79 = vector.shape_cast %76 : vector<4x4x4xf32> to vector<1x4x4x4xf32>
    tpu.vector_store %arg3[%c0_121, %c60, %c0_122, %c0_123], %79 {strides = array<i32>} : memref<1x64x4x4xf32, #tpu.memory_space<vmem>>, vector<1x4x4x4xf32>,
    return
  }
  func.func @transform_0(%arg0: i32, %arg1: i32) -> (i32, i32, i32, i32) {
    %c0_i32 = arith.constant 0 : i32
    %c0_i32_0 = arith.constant 0 : i32
    %c0_i32_1 = arith.constant 0 : i32
    return %arg0, %c0_i32, %arg1, %c0_i32_0 : i32, i32, i32, i32
  }
  func.func @transform_1(%arg0: i32, %arg1: i32) -> (i32, i32, i32, i32) {
    %c0_i32 = arith.constant 0 : i32
    %c0_i32_0 = arith.constant 0 : i32
    %c0_i32_1 = arith.constant 0 : i32
    return %arg0, %c0_i32, %arg1, %c0_i32_0 : i32, i32, i32, i32
  }
}

</mosaic_0001>

<llo_original>
// kernel: pixel_unshuffle.1
$region0: #{pixel_unshuffle.1}
  #allocation0 [shape = 'u32[]', space=smem, size = 0x4, offset = 0x4, fixed_abs, tag = 'smem constant byte address 0x4 - core index']
  #allocation1 [shape = 'u32[144,128]{1,0:T(1,128)}', space=vmem, size = 0x12000, scoped, tag = 'internal scratch']
  #allocation2 [shape = 'f32[4,16,16]{2,1,0:T(8,128)}', space=vmem, size = 0x8000, scoped, tag = 'scratch operand']
  #allocation3 [shape = 'f32[4,16,4]{2,1,0:T(8,128)}', space=vmem, size = 0x8000, scoped, tag = 'scratch operand']
  %s0 = inlined_call_operand.hbm [shape: f32[2,4,16,16], index: 0, kind: input, shape index: {}]
  %s1 = inlined_call_operand.vmem [shape: f32[2,64,4,4], index: 1, kind: output, shape index: {}]
  %s2 = sld [smem:[#allocation0]]
  $region41: #{pixel_unshuffle.1} parent=0
    _
  %s4 = ssub.s32 1, %s2
  %s5 = scalar_select 0, %s4, %s2
  $region1: #{pixel_unshuffle.1} parent=0
    #allocation4 [shape = 'u8[65536]{0}', space=vmem, size = 0x10000, scoped, tag = 'input window, operand 0']
    #allocation5 [shape = 's32[2]{0}', space=sflag, size = 0x8, scoped, tag = 'scoped memory for pixel_unshuffle.1']
    %6 = vsyncpa [#allocation5], 0
    %s7 = scalar_lea.sflag [#allocation5], 1
    %8 = vsyncpa %s7, 0
    loop: start=0, step=1, limit=4
    $region2: #{pixel_unshuffle.1} parent=1 // loop_pre_header
      _
    $region3: #{pixel_unshuffle.1} parent=1 // loop_header
      %s10 = sphi 0, %s14
      %p11 = scmp.ge.s32.totalorder %s10, 4
      %s17 = sphi 0, %s29
      %s18 = sphi 0, %s25
      %s19 = sphi 0, %s17
      %s20 = sphi 0, %s18
      %s21 = sphi 0, %s19
      %s22 = sphi 0, %s20
      %s34 = sphi 0, %s36
      %s37 = sphi 0, %s34
      %s38 = sphi 0, %s37
      %s54 = sphi 0, %s38
      %s62 = sphi 0, %s64
      %s65 = sphi 0, %s62
      %s66 = sphi 0, %s65
      %s82 = sphi 0, %s66
    $region4: #{pixel_unshuffle.1} parent=1 // loop_header_branch
      %13 = sbr.rel (%p11) target = $region8
    $region5: #{pixel_unshuffle.1} parent=1 // loop_body
      %s15 = ssub.s32 %s10, 1
      %s16 = ssub.s32 %s10, 2
      %s23 = sadd.s32 1, %s18
      %p24 = scmp.ge.s32.totalorder %s23, 1
      %s25 = scalar_select %p24, 0, %s23
      %s26 = sadd.s32 1, %s17
      %s27 = scalar_select %p24, %s26, %s17
      %p28 = scmp.ge.s32.totalorder %s27, 2
      %s29 = scalar_select %p28, 0, %s27
      %s30 = ssub.s32 %s17, %s29
      %s31 = ssub.s32 %s18, %s25
      %s32 = sor.u32 %s30, %s31
      %p33 = scmp.eq.s32.totalorder %s32, 0
      %s35 = sadd.s32 %s34, 1
      %s36 = scalar_select %p33, %s34, %s35
      %p39 = pneg %p33
      %p40 = scmp.eq.s32.totalorder %s10, 1
      %p41 = por %p39, %p40
      %p42 = scmp.ne.s32.totalorder %s34, %s37
      %p43 = scmp.eq.s32.totalorder %s10, 0
      %p44 = por %p42, %p43
      %p45 = scmp.ne.s32.totalorder %s34, %s37
      %p46 = scmp.eq.s32.totalorder %s15, 1
      %p47 = por %p45, %p46
      %p48 = scmp.ne.s32.totalorder %s37, %s38
      %p49 = scmp.eq.s32.totalorder %s15, 0
      %p50 = por %p48, %p49
      %p51 = scmp.ne.s32.totalorder %s37, %s38
      %p52 = scmp.eq.s32.totalorder %s16, 1
      %p53 = por %p51, %p52
      %p55 = scmp.ne.s32.totalorder %s38, %s54
      %p56 = scmp.eq.s32.totalorder %s16, 0
      %p57 = por %p55, %p56
      %s58 = ssub.s32 %s17, %s29
      %s59 = ssub.s32 %s18, %s25
      %s60 = sor.u32 %s58, %s59
      %p61 = scmp.eq.s32.totalorder %s60, 0
      %s63 = sadd.s32 %s62, 1
      %s64 = scalar_select %p61, %s62, %s63
      %p67 = pneg %p61
      %p68 = scmp.eq.s32.totalorder %s10, 1
      %p69 = por %p67, %p68
      %p70 = scmp.ne.s32.totalorder %s62, %s65
      %p71 = scmp.eq.s32.totalorder %s10, 0
      %p72 = por %p70, %p71
      %p73 = scmp.ne.s32.totalorder %s62, %s65
      %p74 = scmp.eq.s32.totalorder %s15, 1
      %p75 = por %p73, %p74
      %p76 = scmp.ne.s32.totalorder %s65, %s66
      %p77 = scmp.eq.s32.totalorder %s15, 0
      %p78 = por %p76, %p77
      %p79 = scmp.ne.s32.totalorder %s65, %s66
      %p80 = scmp.eq.s32.totalorder %s16, 1
      %p81 = por %p79, %p80
      %p83 = scmp.ne.s32.totalorder %s66, %s82
      %p84 = scmp.eq.s32.totalorder %s16, 0
      %p85 = por %p83, %p84
      %p86 = scmp.le.s32.totalorder 1, %s10
      %p87 = scmp.lt.s32.totalorder %s10, 3
      %p88 = pnand %p86, %p87
      %p89 = pneg %p88
      // Predicated region
      $region9: #{pixel_unshuffle.1} parent=5 // pred_check
        _
      $region10: #{pixel_unshuffle.1} parent=5 // pred_check_branch
        %91 = sbr.rel (%p88) target = $region12
      $region11: #{pixel_unshuffle.1} parent=5 // pred_region
        %s92 = ssub.s32 %s10, 1
      $region12: #{pixel_unshuffle.1} parent=5 // pred_fallthru
        _
      %p93 = scmp.lt.s32.totalorder %s10, 2
      // Predicated region
      $region13: #{pixel_unshuffle.1} parent=5 // pred_check
        %p94 = pneg %p93
      $region14: #{pixel_unshuffle.1} parent=5 // pred_check_branch
        %96 = sbr.rel (%p94) target = $region16
      $region15: #{pixel_unshuffle.1} parent=5 // pred_region
        // Predicated region
        $region17: #{pixel_unshuffle.1} parent=15 // pred_check
          %p97 = pneg %p44
        $region18: #{pixel_unshuffle.1} parent=15 // pred_check_branch
          %99 = sbr.rel (%p97) target = $region20
        $region19: #{pixel_unshuffle.1} parent=15 // pred_region
          %s100 = sand.u32 %s34, 1
          %s101 = scalar_lea.sflag [#allocation5], %s100
          %s102 = sand.u32 %s34, 1
          %s103 = smul.addr %s102, 64
          %s104 = scalar_lea.vmem [#allocation4], %s103
          %s105 = smul.u32 2, %s18
          %s107 = ssub.s32 1024, 1024
          %108 = vsyncadd %s101, %s107
          %s109 = smul.addr %s17, 8
          %s110 = sadd.s32 %s105, %s109
          %s111 = smul.addr %s110, 128
          %s112 = scalar_lea.hbm %s0, %s111
          %s113 = sshll.u32 %s104, 4
          %s114 = int_to_ptr.vmem [resolvable:$true] %s113
          %119 = dma.hbm_to_vmem [thread:$0]  %s112, 1024, %s114, %s101, 128, 128, 8
        $region20: #{pixel_unshuffle.1} parent=15 // pred_fallthru
          _
      $region16: #{pixel_unshuffle.1} parent=5 // pred_fallthru
        _
      %p120 = scmp.le.s32.totalorder 1, %s10
      %p121 = scmp.lt.s32.totalorder %s10, 3
      %p122 = pnand %p120, %p121
      %p123 = pneg %p122
      // Predicated region
      $region21: #{pixel_unshuffle.1} parent=5 // pred_check
        _
      $region22: #{pixel_unshuffle.1} parent=5 // pred_check_branch
        %125 = sbr.rel (%p122) target = $region24
      $region23: #{pixel_unshuffle.1} parent=5 // pred_region
        %s126 = ssub.s32 %s10, 1
        %s127 = sand.u32 %s37, 1
        %s128 = scalar_lea.sflag [#allocation5], %s127
        %s129 = sand.u32 %s37, 1
        %s130 = smul.addr %s129, 64
        %s131 = scalar_lea.vmem [#allocation4], %s130
        // Predicated region
        $region25: #{pixel_unshuffle.1} parent=23 // pred_check
          %p132 = pneg %p50
        $region26: #{pixel_unshuffle.1} parent=23 // pred_check_branch
          %134 = sbr.rel (%p132) target = $region28
        $region27: #{pixel_unshuffle.1} parent=23 // pred_region
          %135 = dma.done %s128, 1024
        $region28: #{pixel_unshuffle.1} parent=23 // pred_fallthru
          _
        %s136 = sand.u32 %s37, 1
        %s137 = scalar_lea.sflag [#allocation5], %s136
        %s138 = sand.u32 %s37, 1
        %s139 = smul.addr %s138, 64
        %s140 = scalar_lea.vmem [#allocation4], %s139
        %p141 = pneg %p50
        %p142 = pneg %p47
        %p143 = pneg %p78
        %p144 = pneg %p75
        %p145 = scmp.lt.s32.totalorder %s19, 1
        %s146 = scalar_select %p145, %s19, 1
        %p147 = scmp.lt.s32.totalorder %s20, 0
        %s148 = scalar_select %p147, %s20, 0
        %s149 = smul.addr %s146, 64
        %s150 = sadd.s32 %s148, %s149
        %s151 = smul.addr %s150, 4
        %s152 = scalar_lea.vmem %s1, %s151
        %s153 = smul.u32 2, %s20
        %p154 = scmp.lt.s32.totalorder %s19, 1
        %s155 = scalar_select %p154, %s19, 1
        %p156 = scmp.lt.s32.totalorder %s20, 0
        %s157 = scalar_select %p156, %s20, 0
        %s158 = smul.addr %s155, 64
        %s159 = sadd.s32 %s157, %s158
        %s160 = smul.addr %s159, 4
        %s161 = scalar_lea.vmem %s1, %s160
        %v162 = vld [vmem:[%s131] sm:$0xff]
        %v163 = vld [vmem:[%s131 + $0x8] sm:$0xff]
        %v164 = vld [vmem:[%s131 + $0x10] sm:$0xff]
        %v165 = vld [vmem:[%s131 + $0x18] sm:$0xff]
        %v166 = vld [vmem:[%s131 + $0x20] sm:$0xff]
        %v167 = vld [vmem:[%s131 + $0x28] sm:$0xff]
        %v168 = vld [vmem:[%s131 + $0x30] sm:$0xff]
        %v169 = vld [vmem:[%s131 + $0x38] sm:$0xff]
        %170 = vxpose.xlu0.b32.start [1/16] %v162, 128
        %171 = vxpose.xlu0.b32.cont [2/16] %v163, 128
        %172 = vxpose.xlu0.b32.cont [3/16] 0.0, 128
        %173 = vxpose.xlu0.b32.cont [4/16] 0.0, 128
        %174 = vxpose.xlu0.b32.cont [5/16] 0.0, 128
        %175 = vxpose.xlu0.b32.cont [6/16] 0.0, 128
        %176 = vxpose.xlu0.b32.cont [7/16] 0.0, 128
        %177 = vxpose.xlu0.b32.cont [8/16] 0.0, 128
        %178 = vxpose.xlu0.b32.cont [9/16] 0.0, 128
        %179 = vxpose.xlu0.b32.cont [10/16] 0.0, 128
        %180 = vxpose.xlu0.b32.cont [11/16] 0.0, 128
        %181 = vxpose.xlu0.b32.cont [12/16] 0.0, 128
        %182 = vxpose.xlu0.b32.cont [13/16] 0.0, 128
        %183 = vxpose.xlu0.b32.cont [14/16] 0.0, 128
        %184 = vxpose.xlu0.b32.cont [15/16] 0.0, 128
        %185 = vxpose.xlu0.b32.end [16/16] 0.0, 128
        %v186 = vpop.trf.xlu0
        %v187 = vpop.trf.xlu0
        %v188 = vpop.trf.xlu0
        %v189 = vpop.trf.xlu0
        %v190 = vpop.trf.xlu0
        %v191 = vpop.trf.xlu0
        %v192 = vpop.trf.xlu0
        %v193 = vpop.trf.xlu0
        %v194 = vpop.trf.xlu0
        %v195 = vpop.trf.xlu0
        %v196 = vpop.trf.xlu0
        %v197 = vpop.trf.xlu0
        %v198 = vpop.trf.xlu0
        %v199 = vpop.trf.xlu0
        %v200 = vpop.trf.xlu0
        %v201 = vpop.trf.xlu0
        %202 = vxpose.xlu0.b32.start [1/16] %v164, 128
        %203 = vxpose.xlu0.b32.cont [2/16] %v165, 128
        %204 = vxpose.xlu0.b32.cont [3/16] 0.0, 128
        %205 = vxpose.xlu0.b32.cont [4/16] 0.0, 128
        %206 = vxpose.xlu0.b32.cont [5/16] 0.0, 128
        %207 = vxpose.xlu0.b32.cont [6/16] 0.0, 128
        %208 = vxpose.xlu0.b32.cont [7/16] 0.0, 128
        %209 = vxpose.xlu0.b32.cont [8/16] 0.0, 128
        %210 = vxpose.xlu0.b32.cont [9/16] 0.0, 128
        %211 = vxpose.xlu0.b32.cont [10/16] 0.0, 128
        %212 = vxpose.xlu0.b32.cont [11/16] 0.0, 128
        %213 = vxpose.xlu0.b32.cont [12/16] 0.0, 128
        %214 = vxpose.xlu0.b32.cont [13/16] 0.0, 128
        %215 = vxpose.xlu0.b32.cont [14/16] 0.0, 128
        %216 = vxpose.xlu0.b32.cont [15/16] 0.0, 128
        %217 = vxpose.xlu0.b32.end [16/16] 0.0, 128
        %v218 = vpop.trf.xlu0
        %v219 = vpop.trf.xlu0
        %v220 = vpop.trf.xlu0
        %v221 = vpop.trf.xlu0
        %v222 = vpop.trf.xlu0
        %v223 = vpop.trf.xlu0
        %v224 = vpop.trf.xlu0
        %v225 = vpop.trf.xlu0
        %v226 = vpop.trf.xlu0
        %v227 = vpop.trf.xlu0
        %v228 = vpop.trf.xlu0
        %v229 = vpop.trf.xlu0
        %v230 = vpop.trf.xlu0
        %v231 = vpop.trf.xlu0
        %v232 = vpop.trf.xlu0
        %v233 = vpop.trf.xlu0
        %234 = vxpose.xlu0.b32.start [1/16] %v166, 128
        %235 = vxpose.xlu0.b32.cont [2/16] %v167, 128
        %236 = vxpose.xlu0.b32.cont [3/16] 0.0, 128
        %237 = vxpose.xlu0.b32.cont [4/16] 0.0, 128
        %238 = vxpose.xlu0.b32.cont [5/16] 0.0, 128
        %239 = vxpose.xlu0.b32.cont [6/16] 0.0, 128
        %240 = vxpose.xlu0.b32.cont [7/16] 0.0, 128
        %241 = vxpose.xlu0.b32.cont [8/16] 0.0, 128
        %242 = vxpose.xlu0.b32.cont [9/16] 0.0, 128
        %243 = vxpose.xlu0.b32.cont [10/16] 0.0, 128
        %244 = vxpose.xlu0.b32.cont [11/16] 0.0, 128
        %245 = vxpose.xlu0.b32.cont [12/16] 0.0, 128
        %246 = vxpose.xlu0.b32.cont [13/16] 0.0, 128
        %247 = vxpose.xlu0.b32.cont [14/16] 0.0, 128
        %248 = vxpose.xlu0.b32.cont [15/16] 0.0, 128
        %249 = vxpose.xlu0.b32.end [16/16] 0.0, 128
        %v250 = vpop.trf.xlu0
        %v251 = vpop.trf.xlu0
        %v252 = vpop.trf.xlu0
        %v253 = vpop.trf.xlu0
        %v254 = vpop.trf.xlu0
        %v255 = vpop.trf.xlu0
        %v256 = vpop.trf.xlu0
        %v257 = vpop.trf.xlu0
        %v258 = vpop.trf.xlu0
        %v259 = vpop.trf.xlu0
        %v260 = vpop.trf.xlu0
        %v261 = vpop.trf.xlu0
        %v262 = vpop.trf.xlu0
        %v263 = vpop.trf.xlu0
        %v264 = vpop.trf.xlu0
        %v265 = vpop.trf.xlu0
        %266 = vxpose.xlu0.b32.start [1/16] %v168, 128
        %267 = vxpose.xlu0.b32.cont [2/16] %v169, 128
        %268 = vxpose.xlu0.b32.cont [3/16] 0.0, 128
        %269 = vxpose.xlu0.b32.cont [4/16] 0.0, 128
        %270 = vxpose.xlu0.b32.cont [5/16] 0.0, 128
        %271 = vxpose.xlu0.b32.cont [6/16] 0.0, 128
        %272 = vxpose.xlu0.b32.cont [7/16] 0.0, 128
        %273 = vxpose.xlu0.b32.cont [8/16] 0.0, 128
        %274 = vxpose.xlu0.b32.cont [9/16] 0.0, 128
        %275 = vxpose.xlu0.b32.cont [10/16] 0.0, 128
        %276 = vxpose.xlu0.b32.cont [11/16] 0.0, 128
        %277 = vxpose.xlu0.b32.cont [12/16] 0.0, 128
        %278 = vxpose.xlu0.b32.cont [13/16] 0.0, 128
        %279 = vxpose.xlu0.b32.cont [14/16] 0.0, 128
        %280 = vxpose.xlu0.b32.cont [15/16] 0.0, 128
        %281 = vxpose.xlu0.b32.end [16/16] 0.0, 128
        %v282 = vpop.trf.xlu0
        %v283 = vpop.trf.xlu0
        %v284 = vpop.trf.xlu0
        %v285 = vpop.trf.xlu0
        %v286 = vpop.trf.xlu0
        %v287 = vpop.trf.xlu0
        %v288 = vpop.trf.xlu0
        %v289 = vpop.trf.xlu0
        %v290 = vpop.trf.xlu0
        %v291 = vpop.trf.xlu0
        %v292 = vpop.trf.xlu0
        %v293 = vpop.trf.xlu0
        %v294 = vpop.trf.xlu0
        %v295 = vpop.trf.xlu0
        %v296 = vpop.trf.xlu0
        %v297 = vpop.trf.xlu0
        %vm298 = vcmask 130048
        %299 = vst.msk [vmem:[#allocation2] sm:$0xff] %vm298, %v186
        %300 = vst.msk [vmem:[#allocation2 + $0x8] sm:$0xff] %vm298, %v187
        %301 = vst.msk [vmem:[#allocation2 + $0x10] sm:$0xff] %vm298, %v218
        %302 = vst.msk [vmem:[#allocation2 + $0x18] sm:$0xff] %vm298, %v219
        %303 = vst.msk [vmem:[#allocation2 + $0x20] sm:$0xff] %vm298, %v250
        %304 = vst.msk [vmem:[#allocation2 + $0x28] sm:$0xff] %vm298, %v251
        %305 = vst.msk [vmem:[#allocation2 + $0x30] sm:$0xff] %vm298, %v282
        %306 = vst.msk [vmem:[#allocation2 + $0x38] sm:$0xff] %vm298, %v283
        %v307 = vld [vmem:[#allocation2] ss:$4 sm:$0xf]
        %s308 = scalar_lea.vmem [#allocation2], 16
        %v309 = vld [vmem:[%s308] ss:$4 sm:$0xf]
        %s310 = scalar_lea.vmem [#allocation2], 32
        %v311 = vld [vmem:[%s310] ss:$4 sm:$0xf]
        %s312 = scalar_lea.vmem [#allocation2], 48
        %v313 = vld [vmem:[%s312] ss:$4 sm:$0xf]
        %314 = vxpose.xlu0.b32.start [1/16] %v307, 128
        %315 = vxpose.xlu0.b32.cont [2/16] 0.0, 128
        %316 = vxpose.xlu0.b32.cont [3/16] 0.0, 128
        %317 = vxpose.xlu0.b32.cont [4/16] 0.0, 128
        %318 = vxpose.xlu0.b32.cont [5/16] 0.0, 128
        %319 = vxpose.xlu0.b32.cont [6/16] 0.0, 128
        %320 = vxpose.xlu0.b32.cont [7/16] 0.0, 128
        %321 = vxpose.xlu0.b32.cont [8/16] 0.0, 128
        %322 = vxpose.xlu0.b32.cont [9/16] 0.0, 128
        %323 = vxpose.xlu0.b32.cont [10/16] 0.0, 128
        %324 = vxpose.xlu0.b32.cont [11/16] 0.0, 128
        %325 = vxpose.xlu0.b32.cont [12/16] 0.0, 128
        %326 = vxpose.xlu0.b32.cont [13/16] 0.0, 128
        %327 = vxpose.xlu0.b32.cont [14/16] 0.0, 128
        %328 = vxpose.xlu0.b32.cont [15/16] 0.0, 128
        %329 = vxpose.xlu0.b32.end [16/16] 0.0, 128
        %v330 = vpop.trf.xlu0
        %v331 = vpop.trf.xlu0
        %v332 = vpop.trf.xlu0
        %v333 = vpop.trf.xlu0
        %v334 = vpop.trf.xlu0
        %v335 = vpop.trf.xlu0
        %v336 = vpop.trf.xlu0
        %v337 = vpop.trf.xlu0
        %v338 = vpop.trf.xlu0
        %v339 = vpop.trf.xlu0
        %v340 = vpop.trf.xlu0
        %v341 = vpop.trf.xlu0
        %v342 = vpop.trf.xlu0
        %v343 = vpop.trf.xlu0
        %v344 = vpop.trf.xlu0
        %v345 = vpop.trf.xlu0
        %346 = vxpose.xlu0.b32.start [1/16] %v309, 128
        %347 = vxpose.xlu0.b32.cont [2/16] 0.0, 128
        %348 = vxpose.xlu0.b32.cont [3/16] 0.0, 128
        %349 = vxpose.xlu0.b32.cont [4/16] 0.0, 128
        %350 = vxpose.xlu0.b32.cont [5/16] 0.0, 128
        %351 = vxpose.xlu0.b32.cont [6/16] 0.0, 128
        %352 = vxpose.xlu0.b32.cont [7/16] 0.0, 128
        %353 = vxpose.xlu0.b32.cont [8/16] 0.0, 128
        %354 = vxpose.xlu0.b32.cont [9/16] 0.0, 128
        %355 = vxpose.xlu0.b32.cont [10/16] 0.0, 128
        %356 = vxpose.xlu0.b32.cont [11/16] 0.0, 128
        %357 = vxpose.xlu0.b32.cont [12/16] 0.0, 128
        %358 = vxpose.xlu0.b32.cont [13/16] 0.0, 128
        %359 = vxpose.xlu0.b32.cont [14/16] 0.0, 128
        %360 = vxpose.xlu0.b32.cont [15/16] 0.0, 128
        %361 = vxpose.xlu0.b32.end [16/16] 0.0, 128
        %v362 = vpop.trf.xlu0
        %v363 = vpop.trf.xlu0
        %v364 = vpop.trf.xlu0
        %v365 = vpop.trf.xlu0
        %v366 = vpop.trf.xlu0
        %v367 = vpop.trf.xlu0
        %v368 = vpop.trf.xlu0
        %v369 = vpop.trf.xlu0
        %v370 = vpop.trf.xlu0
        %v371 = vpop.trf.xlu0
        %v372 = vpop.trf.xlu0
        %v373 = vpop.trf.xlu0
        %v374 = vpop.trf.xlu0
        %v375 = vpop.trf.xlu0
        %v376 = vpop.trf.xlu0
        %v377 = vpop.trf.xlu0
        %378 = vxpose.xlu0.b32.start [1/16] %v311, 128
        %379 = vxpose.xlu0.b32.cont [2/16] 0.0, 128
        %380 = vxpose.xlu0.b32.cont [3/16] 0.0, 128
        %381 = vxpose.xlu0.b32.cont [4/16] 0.0, 128
        %382 = vxpose.xlu0.b32.cont [5/16] 0.0, 128
        %383 = vxpose.xlu0.b32.cont [6/16] 0.0, 128
        %384 = vxpose.xlu0.b32.cont [7/16] 0.0, 128
        %385 = vxpose.xlu0.b32.cont [8/16] 0.0, 128
        %386 = vxpose.xlu0.b32.cont [9/16] 0.0, 128
        %387 = vxpose.xlu0.b32.cont [10/16] 0.0, 128
        %388 = vxpose.xlu0.b32.cont [11/16] 0.0, 128
        %389 = vxpose.xlu0.b32.cont [12/16] 0.0, 128
        %390 = vxpose.xlu0.b32.cont [13/16] 0.0, 128
        %391 = vxpose.xlu0.b32.cont [14/16] 0.0, 128
        %392 = vxpose.xlu0.b32.cont [15/16] 0.0, 128
        %393 = vxpose.xlu0.b32.end [16/16] 0.0, 128
        %v394 = vpop.trf.xlu0
        %v395 = vpop.trf.xlu0
        %v396 = vpop.trf.xlu0
        %v397 = vpop.trf.xlu0
        %v398 = vpop.trf.xlu0
        %v399 = vpop.trf.xlu0
        %v400 = vpop.trf.xlu0
        %v401 = vpop.trf.xlu0
        %v402 = vpop.trf.xlu0
        %v403 = vpop.trf.xlu0
        %v404 = vpop.trf.xlu0
        %v405 = vpop.trf.xlu0
        %v406 = vpop.trf.xlu0
        %v407 = vpop.trf.xlu0
        %v408 = vpop.trf.xlu0
        %v409 = vpop.trf.xlu0
        %410 = vxpose.xlu0.b32.start [1/16] %v313, 128
        %411 = vxpose.xlu0.b32.cont [2/16] 0.0, 128
        %412 = vxpose.xlu0.b32.cont [3/16] 0.0, 128
        %413 = vxpose.xlu0.b32.cont [4/16] 0.0, 128
        %414 = vxpose.xlu0.b32.cont [5/16] 0.0, 128
        %415 = vxpose.xlu0.b32.cont [6/16] 0.0, 128
        %416 = vxpose.xlu0.b32.cont [7/16] 0.0, 128
        %417 = vxpose.xlu0.b32.cont [8/16] 0.0, 128
        %418 = vxpose.xlu0.b32.cont [9/16] 0.0, 128
        %419 = vxpose.xlu0.b32.cont [10/16] 0.0, 128
        %420 = vxpose.xlu0.b32.cont [11/16] 0.0, 128
        %421 = vxpose.xlu0.b32.cont [12/16] 0.0, 128
        %422 = vxpose.xlu0.b32.cont [13/16] 0.0, 128
        %423 = vxpose.xlu0.b32.cont [14/16] 0.0, 128
        %424 = vxpose.xlu0.b32.cont [15/16] 0.0, 128
        %425 = vxpose.xlu0.b32.end [16/16] 0.0, 128
        %v426 = vpop.trf.xlu0
        %v427 = vpop.trf.xlu0
        %v428 = vpop.trf.xlu0
        %v429 = vpop.trf.xlu0
        %v430 = vpop.trf.xlu0
        %v431 = vpop.trf.xlu0
        %v432 = vpop.trf.xlu0
        %v433 = vpop.trf.xlu0
        %v434 = vpop.trf.xlu0
        %v435 = vpop.trf.xlu0
        %v436 = vpop.trf.xlu0
        %v437 = vpop.trf.xlu0
        %v438 = vpop.trf.xlu0
        %v439 = vpop.trf.xlu0
        %v440 = vpop.trf.xlu0
        %v441 = vpop.trf.xlu0
        %vm442 = vcmask 31744
        %443 = vst.msk [vmem:[#allocation3] sm:$0xff] %vm442, %v330
        %444 = vst.msk [vmem:[#allocation3 + $0x8] sm:$0xff] %vm442, %v331
        %445 = vst.msk [vmem:[#allocation3 + $0x10] sm:$0xff] %vm442, %v362
        %446 = vst.msk [vmem:[#allocation3 + $0x18] sm:$0xff] %vm442, %v363
        %447 = vst.msk [vmem:[#allocation3 + $0x20] sm:$0xff] %vm442, %v394
        %448 = vst.msk [vmem:[#allocation3 + $0x28] sm:$0xff] %vm442, %v395
        %449 = vst.msk [vmem:[#allocation3 + $0x30] sm:$0xff] %vm442, %v426
        %450 = vst.msk [vmem:[#allocation3 + $0x38] sm:$0xff] %vm442, %v427
        %v451 = vld [vmem:[#allocation3] ss:$4 sm:$0xf]
        %s452 = scalar_lea.vmem [#allocation3], 16
        %v453 = vld [vmem:[%s452] ss:$4 sm:$0xf]
        %s454 = scalar_lea.vmem [#allocation3], 32
        %v455 = vld [vmem:[%s454] ss:$4 sm:$0xf]
        %s456 = scalar_lea.vmem [#allocation3], 48
        %v457 = vld [vmem:[%s456] ss:$4 sm:$0xf]
        %vm458 = vcmask 27648
        %459 = vst.msk [vmem:[%s161] sm:$0xf] %vm458, %v451
        %460 = vst.msk [vmem:[%s161 + $0x4] sm:$0xf] %vm458, %v453
        %461 = vst.msk [vmem:[%s161 + $0x8] sm:$0xf] %vm458, %v455
        %462 = vst.msk [vmem:[%s161 + $0xc] sm:$0xf] %vm458, %v457
        %s463 = scalar_lea.vmem [#allocation3], 1
        %v464 = vld [vmem:[%s463] ss:$4 sm:$0xf]
        %s465 = scalar_lea.vmem [#allocation3], 17
        %v466 = vld [vmem:[%s465] ss:$4 sm:$0xf]
        %s467 = scalar_lea.vmem [#allocation3], 33
        %v468 = vld [vmem:[%s467] ss:$4 sm:$0xf]
        %s469 = scalar_lea.vmem [#allocation3], 49
        %v470 = vld [vmem:[%s469] ss:$4 sm:$0xf]
        %s471 = scalar_lea.vmem %s161, 64
        %472 = vst.msk [vmem:[%s471] sm:$0xf] %vm458, %v464
        %473 = vst.msk [vmem:[%s471 + $0x4] sm:$0xf] %vm458, %v466
        %474 = vst.msk [vmem:[%s471 + $0x8] sm:$0xf] %vm458, %v468
        %475 = vst.msk [vmem:[%s471 + $0xc] sm:$0xf] %vm458, %v470
        %s476 = scalar_lea.vmem [#allocation3], 2
        %v477 = vld [vmem:[%s476] ss:$4 sm:$0xf]
        %s478 = scalar_lea.vmem [#allocation3], 18
        %v479 = vld [vmem:[%s478] ss:$4 sm:$0xf]
        %s480 = scalar_lea.vmem [#allocation3], 34
        %v481 = vld [vmem:[%s480] ss:$4 sm:$0xf]
        %s482 = scalar_lea.vmem [#allocation3], 50
        %v483 = vld [vmem:[%s482] ss:$4 sm:$0xf]
        %s484 = scalar_lea.vmem %s161, 128
        %485 = vst.msk [vmem:[%s484] sm:$0xf] %vm458, %v477
        %486 = vst.msk [vmem:[%s484 + $0x4] sm:$0xf] %vm458, %v479
        %487 = vst.msk [vmem:[%s484 + $0x8] sm:$0xf] %vm458, %v481
        %488 = vst.msk [vmem:[%s484 + $0xc] sm:$0xf] %vm458, %v483
        %s489 = scalar_lea.vmem [#allocation3], 3
        %v490 = vld [vmem:[%s489] ss:$4 sm:$0xf]
        %s491 = scalar_lea.vmem [#allocation3], 19
        %v492 = vld [vmem:[%s491] ss:$4 sm:$0xf]
        %s493 = scalar_lea.vmem [#allocation3], 35
        %v494 = vld [vmem:[%s493] ss:$4 sm:$0xf]
        %s495 = scalar_lea.vmem [#allocation3], 51
        %v496 = vld [vmem:[%s495] ss:$4 sm:$0xf]
        %s497 = scalar_lea.vmem %s161, 192
        %498 = vst.msk [vmem:[%s497] sm:$0xf] %vm458, %v490
        %499 = vst.msk [vmem:[%s497 + $0x4] sm:$0xf] %vm458, %v492
        %500 = vst.msk [vmem:[%s497 + $0x8] sm:$0xf] %vm458, %v494
        %501 = vst.msk [vmem:[%s497 + $0xc] sm:$0xf] %vm458, %v496
        %s502 = scalar_lea.vmem [#allocation2], 1
        %v503 = vld [vmem:[%s502] ss:$4 sm:$0xf]
        %s504 = scalar_lea.vmem [#allocation2], 17
        %v505 = vld [vmem:[%s504] ss:$4 sm:$0xf]
        %s506 = scalar_lea.vmem [#allocation2], 33
        %v507 = vld [vmem:[%s506] ss:$4 sm:$0xf]
        %s508 = scalar_lea.vmem [#allocation2], 49
        %v509 = vld [vmem:[%s508] ss:$4 sm:$0xf]
        %510 = vxpose.xlu0.b32.start [1/16] %v503, 128
        %511 = vxpose.xlu0.b32.cont [2/16] 0.0, 128
        %512 = vxpose.xlu0.b32.cont [3/16] 0.0, 128
        %513 = vxpose.xlu0.b32.cont [4/16] 0.0, 128
        %514 = vxpose.xlu0.b32.cont [5/16] 0.0, 128
        %515 = vxpose.xlu0.b32.cont [6/16] 0.0, 128
        %516 = vxpose.xlu0.b32.cont [7/16] 0.0, 128
        %517 = vxpose.xlu0.b32.cont [8/16] 0.0, 128
        %518 = vxpose.xlu0.b32.cont [9/16] 0.0, 128
        %519 = vxpose.xlu0.b32.cont [10/16] 0.0, 128
        %520 = vxpose.xlu0.b32.cont [11/16] 0.0, 128
        %521 = vxpose.xlu0.b32.cont [12/16] 0.0, 128
        %522 = vxpose.xlu0.b32.cont [13/16] 0.0, 128
        %523 = vxpose.xlu0.b32.cont [14/16] 0.0, 128
        %524 = vxpose.xlu0.b32.cont [15/16] 0.0, 128
        %525 = vxpose.xlu0.b32.end [16/16] 0.0, 128
        %v526 = vpop.trf.xlu0
        %v527 = vpop.trf.xlu0
        %v528 = vpop.trf.xlu0
        %v529 = vpop.trf.xlu0
        %v530 = vpop.trf.xlu0
        %v531 = vpop.trf.xlu0
        %v532 = vpop.trf.xlu0
        %v533 = vpop.trf.xlu0
        %v534 = vpop.trf.xlu0
        %v535 = vpop.trf.xlu0
        %v536 = vpop.trf.xlu0
        %v537 = vpop.trf.xlu0
        %v538 = vpop.trf.xlu0
        %v539 = vpop.trf.xlu0
        %v540 = vpop.trf.xlu0
        %v541 = vpop.trf.xlu0
        %542 = vxpose.xlu0.b32.start [1/16] %v505, 128
        %543 = vxpose.xlu0.b32.cont [2/16] 0.0, 128
        %544 = vxpose.xlu0.b32.cont [3/16] 0.0, 128
        %545 = vxpose.xlu0.b32.cont [4/16] 0.0, 128
        %546 = vxpose.xlu0.b32.cont [5/16] 0.0, 128
        %547 = vxpose.xlu0.b32.cont [6/16] 0.0, 128
        %548 = vxpose.xlu0.b32.cont [7/16] 0.0, 128
        %549 = vxpose.xlu0.b32.cont [8/16] 0.0, 128
        %550 = vxpose.xlu0.b32.cont [9/16] 0.0, 128
        %551 = vxpose.xlu0.b32.cont [10/16] 0.0, 128
        %552 = vxpose.xlu0.b32.cont [11/16] 0.0, 128
        %553 = vxpose.xlu0.b32.cont [12/16] 0.0, 128
        %554 = vxpose.xlu0.b32.cont [13/16] 0.0, 128
        %555 = vxpose.xlu0.b32.cont [14/16] 0.0, 128
        %556 = vxpose.xlu0.b32.cont [15/16] 0.0, 128
        %557 = vxpose.xlu0.b32.end [16/16] 0.0, 128
        %v558 = vpop.trf.xlu0
        %v559 = vpop.trf.xlu0
        %v560 = vpop.trf.xlu0
        %v561 = vpop.trf.xlu0
        %v562 = vpop.trf.xlu0
        %v563 = vpop.trf.xlu0
        %v564 = vpop.trf.xlu0
        %v565 = vpop.trf.xlu0
        %v566 = vpop.trf.xlu0
        %v567 = vpop.trf.xlu0
        %v568 = vpop.trf.xlu0
        %v569 = vpop.trf.xlu0
        %v570 = vpop.trf.xlu0
        %v571 = vpop.trf.xlu0
        %v572 = vpop.trf.xlu0
        %v573 = vpop.trf.xlu0
        %574 = vxpose.xlu0.b32.start [1/16] %v507, 128
        %575 = vxpose.xlu0.b32.cont [2/16] 0.0, 128
        %576 = vxpose.xlu0.b32.cont [3/16] 0.0, 128
        %577 = vxpose.xlu0.b32.cont [4/16] 0.0, 128
        %578 = vxpose.xlu0.b32.cont [5/16] 0.0, 128
        %579 = vxpose.xlu0.b32.cont [6/16] 0.0, 128
        %580 = vxpose.xlu0.b32.cont [7/16] 0.0, 128
        %581 = vxpose.xlu0.b32.cont [8/16] 0.0, 128
        %582 = vxpose.xlu0.b32.cont [9/16] 0.0, 128
        %583 = vxpose.xlu0.b32.cont [10/16] 0.0, 128
        %584 = vxpose.xlu0.b32.cont [11/16] 0.0, 128
        %585 = vxpose.xlu0.b32.cont [12/16] 0.0, 128
        %586 = vxpose.xlu0.b32.cont [13/16] 0.0, 128
        %587 = vxpose.xlu0.b32.cont [14/16] 0.0, 128
        %588 = vxpose.xlu0.b32.cont [15/16] 0.0, 128
        %589 = vxpose.xlu0.b32.end [16/16] 0.0, 128
        %v590 = vpop.trf.xlu0
        %v591 = vpop.trf.xlu0
        %v592 = vpop.trf.xlu0
        %v593 = vpop.trf.xlu0
        %v594 = vpop.trf.xlu0
        %v595 = vpop.trf.xlu0
        %v596 = vpop.trf.xlu0
        %v597 = vpop.trf.xlu0
        %v598 = vpop.trf.xlu0
        %v599 = vpop.trf.xlu0
        %v600 = vpop.trf.xlu0
        %v601 = vpop.trf.xlu0
        %v602 = vpop.trf.xlu0
        %v603 = vpop.trf.xlu0
        %v604 = vpop.trf.xlu0
        %v605 = vpop.trf.xlu0
        %606 = vxpose.xlu0.b32.start [1/16] %v509, 128
        %607 = vxpose.xlu0.b32.cont [2/16] 0.0, 128
        %608 = vxpose.xlu0.b32.cont [3/16] 0.0, 128
        %609 = vxpose.xlu0.b32.cont [4/16] 0.0, 128
        %610 = vxpose.xlu0.b32.cont [5/16] 0.0, 128
        %611 = vxpose.xlu0.b32.cont [6/16] 0.0, 128
        %612 = vxpose.xlu0.b32.cont [7/16] 0.0, 128
        %613 = vxpose.xlu0.b32.cont [8/16] 0.0, 128
        %614 = vxpose.xlu0.b32.cont [9/16] 0.0, 128
        %615 = vxpose.xlu0.b32.cont [10/16] 0.0, 128
        %616 = vxpose.xlu0.b32.cont [11/16] 0.0, 128
        %617 = vxpose.xlu0.b32.cont [12/16] 0.0, 128
        %618 = vxpose.xlu0.b32.cont [13/16] 0.0, 128
        %619 = vxpose.xlu0.b32.cont [14/16] 0.0, 128
        %620 = vxpose.xlu0.b32.cont [15/16] 0.0, 128
        %621 = vxpose.xlu0.b32.end [16/16] 0.0, 128
        %v622 = vpop.trf.xlu0
        %v623 = vpop.trf.xlu0
        %v624 = vpop.trf.xlu0
        %v625 = vpop.trf.xlu0
        %v626 = vpop.trf.xlu0
        %v627 = vpop.trf.xlu0
        %v628 = vpop.trf.xlu0
        %v629 = vpop.trf.xlu0
        %v630 = vpop.trf.xlu0
        %v631 = vpop.trf.xlu0
        %v632 = vpop.trf.xlu0
        %v633 = vpop.trf.xlu0
        %v634 = vpop.trf.xlu0
        %v635 = vpop.trf.xlu0
        %v636 = vpop.trf.xlu0
        %v637 = vpop.trf.xlu0
        %638 = vst.msk [vmem:[#allocation3] sm:$0xff] %vm442, %v526
        %639 = vst.msk [vmem:[#allocation3 + $0x8] sm:$0xff] %vm442, %v527
        %640 = vst.msk [vmem:[#allocation3 + $0x10] sm:$0xff] %vm442, %v558
        %641 = vst.msk [vmem:[#allocation3 + $0x18] sm:$0xff] %vm442, %v559
        %642 = vst.msk [vmem:[#allocation3 + $0x20] sm:$0xff] %vm442, %v590
        %643 = vst.msk [vmem:[#allocation3 + $0x28] sm:$0xff] %vm442, %v591
        %644 = vst.msk [vmem:[#allocation3 + $0x30] sm:$0xff] %vm442, %v622
        %645 = vst.msk [vmem:[#allocation3 + $0x38] sm:$0xff] %vm442, %v623
        %v646 = vld [vmem:[#allocation3] ss:$4 sm:$0xf]
        %v647 = vld [vmem:[%s452] ss:$4 sm:$0xf]
        %v648 = vld [vmem:[%s454] ss:$4 sm:$0xf]
        %v649 = vld [vmem:[%s456] ss:$4 sm:$0xf]
        %s650 = scalar_lea.vmem %s161, 16
        %651 = vst.msk [vmem:[%s650] sm:$0xf] %vm458, %v646
        %652 = vst.msk [vmem:[%s650 + $0x4] sm:$0xf] %vm458, %v647
        %653 = vst.msk [vmem:[%s650 + $0x8] sm:$0xf] %vm458, %v648
        %654 = vst.msk [vmem:[%s650 + $0xc] sm:$0xf] %vm458, %v649
        %v655 = vld [vmem:[%s463] ss:$4 sm:$0xf]
        %v656 = vld [vmem:[%s465] ss:$4 sm:$0xf]
        %v657 = vld [vmem:[%s467] ss:$4 sm:$0xf]
        %v658 = vld [vmem:[%s469] ss:$4 sm:$0xf]
        %s659 = scalar_lea.vmem %s161, 80
        %660 = vst.msk [vmem:[%s659] sm:$0xf] %vm458, %v655
        %661 = vst.msk [vmem:[%s659 + $0x4] sm:$0xf] %vm458, %v656
        %662 = vst.msk [vmem:[%s659 + $0x8] sm:$0xf] %vm458, %v657
        %663 = vst.msk [vmem:[%s659 + $0xc] sm:$0xf] %vm458, %v658
        %v664 = vld [vmem:[%s476] ss:$4 sm:$0xf]
        %v665 = vld [vmem:[%s478] ss:$4 sm:$0xf]
        %v666 = vld [vmem:[%s480] ss:$4 sm:$0xf]
        %v667 = vld [vmem:[%s482] ss:$4 sm:$0xf]
        %s668 = scalar_lea.vmem %s161, 144
        %669 = vst.msk [vmem:[%s668] sm:$0xf] %vm458, %v664
        %670 = vst.msk [vmem:[%s668 + $0x4] sm:$0xf] %vm458, %v665
        %671 = vst.msk [vmem:[%s668 + $0x8] sm:$0xf] %vm458, %v666
        %672 = vst.msk [vmem:[%s668 + $0xc] sm:$0xf] %vm458, %v667
        %v673 = vld [vmem:[%s489] ss:$4 sm:$0xf]
        %v674 = vld [vmem:[%s491] ss:$4 sm:$0xf]
        %v675 = vld [vmem:[%s493] ss:$4 sm:$0xf]
        %v676 = vld [vmem:[%s495] ss:$4 sm:$0xf]
        %s677 = scalar_lea.vmem %s161, 208
        %678 = vst.msk [vmem:[%s677] sm:$0xf] %vm458, %v673
        %679 = vst.msk [vmem:[%s677 + $0x4] sm:$0xf] %vm458, %v674
        %680 = vst.msk [vmem:[%s677 + $0x8] sm:$0xf] %vm458, %v675
        %681 = vst.msk [vmem:[%s677 + $0xc] sm:$0xf] %vm458, %v676
        %s682 = scalar_lea.vmem [#allocation2], 2
        %v683 = vld [vmem:[%s682] ss:$4 sm:$0xf]
        %s684 = scalar_lea.vmem [#allocation2], 18
        %v685 = vld [vmem:[%s684] ss:$4 sm:$0xf]
        %s686 = scalar_lea.vmem [#allocation2], 34
        %v687 = vld [vmem:[%s686] ss:$4 sm:$0xf]
        %s688 = scalar_lea.vmem [#allocation2], 50
        %v689 = vld [vmem:[%s688] ss:$4 sm:$0xf]
        %690 = vxpose.xlu0.b32.start [1/16] %v683, 128
        %691 = vxpose.xlu0.b32.cont [2/16] 0.0, 128
        %692 = vxpose.xlu0.b32.cont [3/16] 0.0, 128
        %693 = vxpose.xlu0.b32.cont [4/16] 0.0, 128
        %694 = vxpose.xlu0.b32.cont [5/16] 0.0, 128
        %695 = vxpose.xlu0.b32.cont [6/16] 0.0, 128
        %696 = vxpose.xlu0.b32.cont [7/16] 0.0, 128
        %697 = vxpose.xlu0.b32.cont [8/16] 0.0, 128
        %698 = vxpose.xlu0.b32.cont [9/16] 0.0, 128
        %699 = vxpose.xlu0.b32.cont [10/16] 0.0, 128
        %700 = vxpose.xlu0.b32.cont [11/16] 0.0, 128
        %701 = vxpose.xlu0.b32.cont [12/16] 0.0, 128
        %702 = vxpose.xlu0.b32.cont [13/16] 0.0, 128
        %703 = vxpose.xlu0.b32.cont [14/16] 0.0, 128
        %704 = vxpose.xlu0.b32.cont [15/16] 0.0, 128
        %705 = vxpose.xlu0.b32.end [16/16] 0.0, 128
        %v706 = vpop.trf.xlu0
        %v707 = vpop.trf.xlu0
        %v708 = vpop.trf.xlu0
        %v709 = vpop.trf.xlu0
        %v710 = vpop.trf.xlu0
        %v711 = vpop.trf.xlu0
        %v712 = vpop.trf.xlu0
        %v713 = vpop.trf.xlu0
        %v714 = vpop.trf.xlu0
        %v715 = vpop.trf.xlu0
        %v716 = vpop.trf.xlu0
        %v717 = vpop.trf.xlu0
        %v718 = vpop.trf.xlu0
        %v719 = vpop.trf.xlu0
        %v720 = vpop.trf.xlu0
        %v721 = vpop.trf.xlu0
        %722 = vxpose.xlu0.b32.start [1/16] %v685, 128
        %723 = vxpose.xlu0.b32.cont [2/16] 0.0, 128
        %724 = vxpose.xlu0.b32.cont [3/16] 0.0, 128
        %725 = vxpose.xlu0.b32.cont [4/16] 0.0, 128
        %726 = vxpose.xlu0.b32.cont [5/16] 0.0, 128
        %727 = vxpose.xlu0.b32.cont [6/16] 0.0, 128
        %728 = vxpose.xlu0.b32.cont [7/16] 0.0, 128
        %729 = vxpose.xlu0.b32.cont [8/16] 0.0, 128
        %730 = vxpose.xlu0.b32.cont [9/16] 0.0, 128
        %731 = vxpose.xlu0.b32.cont [10/16] 0.0, 128
        %732 = vxpose.xlu0.b32.cont [11/16] 0.0, 128
        %733 = vxpose.xlu0.b32.cont [12/16] 0.0, 128
        %734 = vxpose.xlu0.b32.cont [13/16] 0.0, 128
        %735 = vxpose.xlu0.b32.cont [14/16] 0.0, 128
        %736 = vxpose.xlu0.b32.cont [15/16] 0.0, 128
        %737 = vxpose.xlu0.b32.end [16/16] 0.0, 128
        %v738 = vpop.trf.xlu0
        %v739 = vpop.trf.xlu0
        %v740 = vpop.trf.xlu0
        %v741 = vpop.trf.xlu0
        %v742 = vpop.trf.xlu0
        %v743 = vpop.trf.xlu0
        %v744 = vpop.trf.xlu0
        %v745 = vpop.trf.xlu0
        %v746 = vpop.trf.xlu0
        %v747 = vpop.trf.xlu0
        %v748 = vpop.trf.xlu0
        %v749 = vpop.trf.xlu0
        %v750 = vpop.trf.xlu0
        %v751 = vpop.trf.xlu0
        %v752 = vpop.trf.xlu0
        %v753 = vpop.trf.xlu0
        %754 = vxpose.xlu0.b32.start [1/16] %v687, 128
        %755 = vxpose.xlu0.b32.cont [2/16] 0.0, 128
        %756 = vxpose.xlu0.b32.cont [3/16] 0.0, 128
        %757 = vxpose.xlu0.b32.cont [4/16] 0.0, 128
        %758 = vxpose.xlu0.b32.cont [5/16] 0.0, 128
        %759 = vxpose.xlu0.b32.cont [6/16] 0.0, 128
        %760 = vxpose.xlu0.b32.cont [7/16] 0.0, 128
        %761 = vxpose.xlu0.b32.cont [8/16] 0.0, 128
        %762 = vxpose.xlu0.b32.cont [9/16] 0.0, 128
        %763 = vxpose.xlu0.b32.cont [10/16] 0.0, 128
        %764 = vxpose.xlu0.b32.cont [11/16] 0.0, 128
        %765 = vxpose.xlu0.b32.cont [12/16] 0.0, 128
        %766 = vxpose.xlu0.b32.cont [13/16] 0.0, 128
        %767 = vxpose.xlu0.b32.cont [14/16] 0.0, 128
        %768 = vxpose.xlu0.b32.cont [15/16] 0.0, 128
        %769 = vxpose.xlu0.b32.end [16/16] 0.0, 128
        %v770 = vpop.trf.xlu0
        %v771 = vpop.trf.xlu0
        %v772 = vpop.trf.xlu0
        %v773 = vpop.trf.xlu0
        %v774 = vpop.trf.xlu0
        %v775 = vpop.trf.xlu0
        %v776 = vpop.trf.xlu0
        %v777 = vpop.trf.xlu0
        %v778 = vpop.trf.xlu0
        %v779 = vpop.trf.xlu0
        %v780 = vpop.trf.xlu0
        %v781 = vpop.trf.xlu0
        %v782 = vpop.trf.xlu0
        %v783 = vpop.trf.xlu0
        %v784 = vpop.trf.xlu0
        %v785 = vpop.trf.xlu0
        %786 = vxpose.xlu0.b32.start [1/16] %v689, 128
        %787 = vxpose.xlu0.b32.cont [2/16] 0.0, 128
        %788 = vxpose.xlu0.b32.cont [3/16] 0.0, 128
        %789 = vxpose.xlu0.b32.cont [4/16] 0.0, 128
        %790 = vxpose.xlu0.b32.cont [5/16] 0.0, 128
        %791 = vxpose.xlu0.b32.cont [6/16] 0.0, 128
        %792 = vxpose.xlu0.b32.cont [7/16] 0.0, 128
        %793 = vxpose.xlu0.b32.cont [8/16] 0.0, 128
        %794 = vxpose.xlu0.b32.cont [9/16] 0.0, 128
        %795 = vxpose.xlu0.b32.cont [10/16] 0.0, 128
        %796 = vxpose.xlu0.b32.cont [11/16] 0.0, 128
        %797 = vxpose.xlu0.b32.cont [12/16] 0.0, 128
        %798 = vxpose.xlu0.b32.cont [13/16] 0.0, 128
        %799 = vxpose.xlu0.b32.cont [14/16] 0.0, 128
        %800 = vxpose.xlu0.b32.cont [15/16] 0.0, 128
        %801 = vxpose.xlu0.b32.end [16/16] 0.0, 128
        %v802 = vpop.trf.xlu0
        %v803 = vpop.trf.xlu0
        %v804 = vpop.trf.xlu0
        %v805 = vpop.trf.xlu0
        %v806 = vpop.trf.xlu0
        %v807 = vpop.trf.xlu0
        %v808 = vpop.trf.xlu0
        %v809 = vpop.trf.xlu0
        %v810 = vpop.trf.xlu0
        %v811 = vpop.trf.xlu0
        %v812 = vpop.trf.xlu0
        %v813 = vpop.trf.xlu0
        %v814 = vpop.trf.xlu0
        %v815 = vpop.trf.xlu0
        %v816 = vpop.trf.xlu0
        %v817 = vpop.trf.xlu0
        %818 = vst.msk [vmem:[#allocation3] sm:$0xff] %vm442, %v706
        %819 = vst.msk [vmem:[#allocation3 + $0x8] sm:$0xff] %vm442, %v707
        %820 = vst.msk [vmem:[#allocation3 + $0x10] sm:$0xff] %vm442, %v738
        %821 = vst.msk [vmem:[#allocation3 + $0x18] sm:$0xff] %vm442, %v739
        %822 = vst.msk [vmem:[#allocation3 + $0x20] sm:$0xff] %vm442, %v770
        %823 = vst.msk [vmem:[#allocation3 + $0x28] sm:$0xff] %vm442, %v771
        %824 = vst.msk [vmem:[#allocation3 + $0x30] sm:$0xff] %vm442, %v802
        %825 = vst.msk [vmem:[#allocation3 + $0x38] sm:$0xff] %vm442, %v803
        %v826 = vld [vmem:[#allocation3] ss:$4 sm:$0xf]
        %v827 = vld [vmem:[%s452] ss:$4 sm:$0xf]
        %v828 = vld [vmem:[%s454] ss:$4 sm:$0xf]
        %v829 = vld [vmem:[%s456] ss:$4 sm:$0xf]
        %s830 = scalar_lea.vmem %s161, 32
        %831 = vst.msk [vmem:[%s830] sm:$0xf] %vm458, %v826
        %832 = vst.msk [vmem:[%s830 + $0x4] sm:$0xf] %vm458, %v827
        %833 = vst.msk [vmem:[%s830 + $0x8] sm:$0xf] %vm458, %v828
        %834 = vst.msk [vmem:[%s830 + $0xc] sm:$0xf] %vm458, %v829
        %v835 = vld [vmem:[%s463] ss:$4 sm:$0xf]
        %v836 = vld [vmem:[%s465] ss:$4 sm:$0xf]
        %v837 = vld [vmem:[%s467] ss:$4 sm:$0xf]
        %v838 = vld [vmem:[%s469] ss:$4 sm:$0xf]
        %s839 = scalar_lea.vmem %s161, 96
        %840 = vst.msk [vmem:[%s839] sm:$0xf] %vm458, %v835
        %841 = vst.msk [vmem:[%s839 + $0x4] sm:$0xf] %vm458, %v836
        %842 = vst.msk [vmem:[%s839 + $0x8] sm:$0xf] %vm458, %v837
        %843 = vst.msk [vmem:[%s839 + $0xc] sm:$0xf] %vm458, %v838
        %v844 = vld [vmem:[%s476] ss:$4 sm:$0xf]
        %v845 = vld [vmem:[%s478] ss:$4 sm:$0xf]
        %v846 = vld [vmem:[%s480] ss:$4 sm:$0xf]
        %v847 = vld [vmem:[%s482] ss:$4 sm:$0xf]
        %s848 = scalar_lea.vmem %s161, 160
        %849 = vst.msk [vmem:[%s848] sm:$0xf] %vm458, %v844
        %850 = vst.msk [vmem:[%s848 + $0x4] sm:$0xf] %vm458, %v845
        %851 = vst.msk [vmem:[%s848 + $0x8] sm:$0xf] %vm458, %v846
        %852 = vst.msk [vmem:[%s848 + $0xc] sm:$0xf] %vm458, %v847
        %v853 = vld [vmem:[%s489] ss:$4 sm:$0xf]
        %v854 = vld [vmem:[%s491] ss:$4 sm:$0xf]
        %v855 = vld [vmem:[%s493] ss:$4 sm:$0xf]
        %v856 = vld [vmem:[%s495] ss:$4 sm:$0xf]
        %s857 = scalar_lea.vmem %s161, 224
        %858 = vst.msk [vmem:[%s857] sm:$0xf] %vm458, %v853
        %859 = vst.msk [vmem:[%s857 + $0x4] sm:$0xf] %vm458, %v854
        %860 = vst.msk [vmem:[%s857 + $0x8] sm:$0xf] %vm458, %v855
        %861 = vst.msk [vmem:[%s857 + $0xc] sm:$0xf] %vm458, %v856
        %s862 = scalar_lea.vmem [#allocation2], 3
        %v863 = vld [vmem:[%s862] ss:$4 sm:$0xf]
        %s864 = scalar_lea.vmem [#allocation2], 19
        %v865 = vld [vmem:[%s864] ss:$4 sm:$0xf]
        %s866 = scalar_lea.vmem [#allocation2], 35
        %v867 = vld [vmem:[%s866] ss:$4 sm:$0xf]
        %s868 = scalar_lea.vmem [#allocation2], 51
        %v869 = vld [vmem:[%s868] ss:$4 sm:$0xf]
        %870 = vxpose.xlu0.b32.start [1/16] %v863, 128
        %871 = vxpose.xlu0.b32.cont [2/16] 0.0, 128
        %872 = vxpose.xlu0.b32.cont [3/16] 0.0, 128
        %873 = vxpose.xlu0.b32.cont [4/16] 0.0, 128
        %874 = vxpose.xlu0.b32.cont [5/16] 0.0, 128
        %875 = vxpose.xlu0.b32.cont [6/16] 0.0, 128
        %876 = vxpose.xlu0.b32.cont [7/16] 0.0, 128
        %877 = vxpose.xlu0.b32.cont [8/16] 0.0, 128
        %878 = vxpose.xlu0.b32.cont [9/16] 0.0, 128
        %879 = vxpose.xlu0.b32.cont [10/16] 0.0, 128
        %880 = vxpose.xlu0.b32.cont [11/16] 0.0, 128
        %881 = vxpose.xlu0.b32.cont [12/16] 0.0, 128
        %882 = vxpose.xlu0.b32.cont [13/16] 0.0, 128
        %883 = vxpose.xlu0.b32.cont [14/16] 0.0, 128
        %884 = vxpose.xlu0.b32.cont [15/16] 0.0, 128
        %885 = vxpose.xlu0.b32.end [16/16] 0.0, 128
        %v886 = vpop.trf.xlu0
        %v887 = vpop.trf.xlu0
        %v888 = vpop.trf.xlu0
        %v889 = vpop.trf.xlu0
        %v890 = vpop.trf.xlu0
        %v891 = vpop.trf.xlu0
        %v892 = vpop.trf.xlu0
        %v893 = vpop.trf.xlu0
        %v894 = vpop.trf.xlu0
        %v895 = vpop.trf.xlu0
        %v896 = vpop.trf.xlu0
        %v897 = vpop.trf.xlu0
        %v898 = vpop.trf.xlu0
        %v899 = vpop.trf.xlu0
        %v900 = vpop.trf.xlu0
        %v901 = vpop.trf.xlu0
        %902 = vxpose.xlu0.b32.start [1/16] %v865, 128
        %903 = vxpose.xlu0.b32.cont [2/16] 0.0, 128
        %904 = vxpose.xlu0.b32.cont [3/16] 0.0, 128
        %905 = vxpose.xlu0.b32.cont [4/16] 0.0, 128
        %906 = vxpose.xlu0.b32.cont [5/16] 0.0, 128
        %907 = vxpose.xlu0.b32.cont [6/16] 0.0, 128
        %908 = vxpose.xlu0.b32.cont [7/16] 0.0, 128
        %909 = vxpose.xlu0.b32.cont [8/16] 0.0, 128
        %910 = vxpose.xlu0.b32.cont [9/16] 0.0, 128
        %911 = vxpose.xlu0.b32.cont [10/16] 0.0, 128
        %912 = vxpose.xlu0.b32.cont [11/16] 0.0, 128
        %913 = vxpose.xlu0.b32.cont [12/16] 0.0, 128
        %914 = vxpose.xlu0.b32.cont [13/16] 0.0, 128
        %915 = vxpose.xlu0.b32.cont [14/16] 0.0, 128
        %916 = vxpose.xlu0.b32.cont [15/16] 0.0, 128
        %917 = vxpose.xlu0.b32.end [16/16] 0.0, 128
        %v918 = vpop.trf.xlu0
        %v919 = vpop.trf.xlu0
        %v920 = vpop.trf.xlu0
        %v921 = vpop.trf.xlu0
        %v922 = vpop.trf.xlu0
        %v923 = vpop.trf.xlu0
        %v924 = vpop.trf.xlu0
        %v925 = vpop.trf.xlu0
        %v926 = vpop.trf.xlu0
        %v927 = vpop.trf.xlu0
        %v928 = vpop.trf.xlu0
        %v929 = vpop.trf.xlu0
        %v930 = vpop.trf.xlu0
        %v931 = vpop.trf.xlu0
        %v932 = vpop.trf.xlu0
        %v933 = vpop.trf.xlu0
        %934 = vxpose.xlu0.b32.start [1/16] %v867, 128
        %935 = vxpose.xlu0.b32.cont [2/16] 0.0, 128
        %936 = vxpose.xlu0.b32.cont [3/16] 0.0, 128
        %937 = vxpose.xlu0.b32.cont [4/16] 0.0, 128
        %938 = vxpose.xlu0.b32.cont [5/16] 0.0, 128
        %939 = vxpose.xlu0.b32.cont [6/16] 0.0, 128
        %940 = vxpose.xlu0.b32.cont [7/16] 0.0, 128
        %941 = vxpose.xlu0.b32.cont [8/16] 0.0, 128
        %942 = vxpose.xlu0.b32.cont [9/16] 0.0, 128
        %943 = vxpose.xlu0.b32.cont [10/16] 0.0, 128
        %944 = vxpose.xlu0.b32.cont [11/16] 0.0, 128
        %945 = vxpose.xlu0.b32.cont [12/16] 0.0, 128
        %946 = vxpose.xlu0.b32.cont [13/16] 0.0, 128
        %947 = vxpose.xlu0.b32.cont [14/16] 0.0, 128
        %948 = vxpose.xlu0.b32.cont [15/16] 0.0, 128
        %949 = vxpose.xlu0.b32.end [16/16] 0.0, 128
        %v950 = vpop.trf.xlu0
        %v951 = vpop.trf.xlu0
        %v952 = vpop.trf.xlu0
        %v953 = vpop.trf.xlu0
        %v954 = vpop.trf.xlu0
        %v955 = vpop.trf.xlu0
        %v956 = vpop.trf.xlu0
        %v957 = vpop.trf.xlu0
        %v958 = vpop.trf.xlu0
        %v959 = vpop.trf.xlu0
        %v960 = vpop.trf.xlu0
        %v961 = vpop.trf.xlu0
        %v962 = vpop.trf.xlu0
        %v963 = vpop.trf.xlu0
        %v964 = vpop.trf.xlu0
        %v965 = vpop.trf.xlu0
        %966 = vxpose.xlu0.b32.start [1/16] %v869, 128
        %967 = vxpose.xlu0.b32.cont [2/16] 0.0, 128
        %968 = vxpose.xlu0.b32.cont [3/16] 0.0, 128
        %969 = vxpose.xlu0.b32.cont [4/16] 0.0, 128
        %970 = vxpose.xlu0.b32.cont [5/16] 0.0, 128
        %971 = vxpose.xlu0.b32.cont [6/16] 0.0, 128
        %972 = vxpose.xlu0.b32.cont [7/16] 0.0, 128
        %973 = vxpose.xlu0.b32.cont [8/16] 0.0, 128
        %974 = vxpose.xlu0.b32.cont [9/16] 0.0, 128
        %975 = vxpose.xlu0.b32.cont [10/16] 0.0, 128
        %976 = vxpose.xlu0.b32.cont [11/16] 0.0, 128
        %977 = vxpose.xlu0.b32.cont [12/16] 0.0, 128
        %978 = vxpose.xlu0.b32.cont [13/16] 0.0, 128
        %979 = vxpose.xlu0.b32.cont [14/16] 0.0, 128
        %980 = vxpose.xlu0.b32.cont [15/16] 0.0, 128
        %981 = vxpose.xlu0.b32.end [16/16] 0.0, 128
        %v982 = vpop.trf.xlu0
        %v983 = vpop.trf.xlu0
        %v984 = vpop.trf.xlu0
        %v985 = vpop.trf.xlu0
        %v986 = vpop.trf.xlu0
        %v987 = vpop.trf.xlu0
        %v988 = vpop.trf.xlu0
        %v989 = vpop.trf.xlu0
        %v990 = vpop.trf.xlu0
        %v991 = vpop.trf.xlu0
        %v992 = vpop.trf.xlu0
        %v993 = vpop.trf.xlu0
        %v994 = vpop.trf.xlu0
        %v995 = vpop.trf.xlu0
        %v996 = vpop.trf.xlu0
        %v997 = vpop.trf.xlu0
        %998 = vst.msk [vmem:[#allocation3] sm:$0xff] %vm442, %v886
        %999 = vst.msk [vmem:[#allocation3 + $0x8] sm:$0xff] %vm442, %v887
        %1000 = vst.msk [vmem:[#allocation3 + $0x10] sm:$0xff] %vm442, %v918
        %1001 = vst.msk [vmem:[#allocation3 + $0x18] sm:$0xff] %vm442, %v919
        %1002 = vst.msk [vmem:[#allocation3 + $0x20] sm:$0xff] %vm442, %v950
        %1003 = vst.msk [vmem:[#allocation3 + $0x28] sm:$0xff] %vm442, %v951
        %1004 = vst.msk [vmem:[#allocation3 + $0x30] sm:$0xff] %vm442, %v982
        %1005 = vst.msk [vmem:[#allocation3 + $0x38] sm:$0xff] %vm442, %v983
        %v1006 = vld [vmem:[#allocation3] ss:$4 sm:$0xf]
        %v1007 = vld [vmem:[%s452] ss:$4 sm:$0xf]
        %v1008 = vld [vmem:[%s454] ss:$4 sm:$0xf]
        %v1009 = vld [vmem:[%s456] ss:$4 sm:$0xf]
        %s1010 = scalar_lea.vmem %s161, 48
        %1011 = vst.msk [vmem:[%s1010] sm:$0xf] %vm458, %v1006
        %1012 = vst.msk [vmem:[%s1010 + $0x4] sm:$0xf] %vm458, %v1007
        %1013 = vst.msk [vmem:[%s1010 + $0x8] sm:$0xf] %vm458, %v1008
        %1014 = vst.msk [vmem:[%s1010 + $0xc] sm:$0xf] %vm458, %v1009
        %v1015 = vld [vmem:[%s463] ss:$4 sm:$0xf]
        %v1016 = vld [vmem:[%s465] ss:$4 sm:$0xf]
        %v1017 = vld [vmem:[%s467] ss:$4 sm:$0xf]
        %v1018 = vld [vmem:[%s469] ss:$4 sm:$0xf]
        %s1019 = scalar_lea.vmem %s161, 112
        %1020 = vst.msk [vmem:[%s1019] sm:$0xf] %vm458, %v1015
        %1021 = vst.msk [vmem:[%s1019 + $0x4] sm:$0xf] %vm458, %v1016
        %1022 = vst.msk [vmem:[%s1019 + $0x8] sm:$0xf] %vm458, %v1017
        %1023 = vst.msk [vmem:[%s1019 + $0xc] sm:$0xf] %vm458, %v1018
        %v1024 = vld [vmem:[%s476] ss:$4 sm:$0xf]
        %v1025 = vld [vmem:[%s478] ss:$4 sm:$0xf]
        %v1026 = vld [vmem:[%s480] ss:$4 sm:$0xf]
        %v1027 = vld [vmem:[%s482] ss:$4 sm:$0xf]
        %s1028 = scalar_lea.vmem %s161, 176
        %1029 = vst.msk [vmem:[%s1028] sm:$0xf] %vm458, %v1024
        %1030 = vst.msk [vmem:[%s1028 + $0x4] sm:$0xf] %vm458, %v1025
        %1031 = vst.msk [vmem:[%s1028 + $0x8] sm:$0xf] %vm458, %v1026
        %1032 = vst.msk [vmem:[%s1028 + $0xc] sm:$0xf] %vm458, %v1027
        %v1033 = vld [vmem:[%s489] ss:$4 sm:$0xf]
        %v1034 = vld [vmem:[%s491] ss:$4 sm:$0xf]
        %v1035 = vld [vmem:[%s493] ss:$4 sm:$0xf]
        %v1036 = vld [vmem:[%s495] ss:$4 sm:$0xf]
        %s1037 = scalar_lea.vmem %s161, 240
        %1038 = vst.msk [vmem:[%s1037] sm:$0xf] %vm458, %v1033
        %1039 = vst.msk [vmem:[%s1037 + $0x4] sm:$0xf] %vm458, %v1034
        %1040 = vst.msk [vmem:[%s1037 + $0x8] sm:$0xf] %vm458, %v1035
        %1041 = vst.msk [vmem:[%s1037 + $0xc] sm:$0xf] %vm458, %v1036
        %p1042 = scmp.lt.s32.totalorder %s19, 1
        %s1043 = scalar_select %p1042, %s19, 1
        %p1044 = scmp.lt.s32.totalorder %s20, 0
        %s1045 = scalar_select %p1044, %s20, 0
        %s1046 = smul.addr %s1043, 64
        %s1047 = sadd.s32 %s1045, %s1046
        %s1048 = smul.addr %s1047, 4
        %s1049 = scalar_lea.vmem %s1, %s1048
        // Predicated region
        $region29: #{pixel_unshuffle.1} parent=23 // pred_check
          %p1050 = pneg %p75
        $region30: #{pixel_unshuffle.1} parent=23 // pred_check_branch
          %1052 = sbr.rel (%p1050) target = $region32
        $region31: #{pixel_unshuffle.1} parent=23 // pred_region
          _
        $region32: #{pixel_unshuffle.1} parent=23 // pred_fallthru
          _
      $region24: #{pixel_unshuffle.1} parent=5 // pred_fallthru
        _
      %p1053 = scmp.le.s32.totalorder 2, %s10
      // Predicated region
      $region33: #{pixel_unshuffle.1} parent=5 // pred_check
        %p1054 = pneg %p1053
      $region34: #{pixel_unshuffle.1} parent=5 // pred_check_branch
        %1056 = sbr.rel (%p1054) target = $region36
      $region35: #{pixel_unshuffle.1} parent=5 // pred_region
        %s1057 = ssub.s32 %s10, 2
        // Predicated region
        $region37: #{pixel_unshuffle.1} parent=35 // pred_check
          %p1058 = pneg %p81
        $region38: #{pixel_unshuffle.1} parent=35 // pred_check_branch
          %1060 = sbr.rel (%p1058) target = $region40
        $region39: #{pixel_unshuffle.1} parent=35 // pred_region
          %p1061 = scmp.lt.s32.totalorder %s21, 1
          %s1062 = scalar_select %p1061, %s21, 1
          %p1063 = scmp.lt.s32.totalorder %s22, 0
          %s1064 = scalar_select %p1063, %s22, 0
          %s1065 = smul.addr %s1062, 64
          %s1066 = sadd.s32 %s1064, %s1065
          %s1067 = smul.addr %s1066, 4
          %s1068 = scalar_lea.vmem %s1, %s1067
        $region40: #{pixel_unshuffle.1} parent=35 // pred_fallthru
          _
      $region36: #{pixel_unshuffle.1} parent=5 // pred_fallthru
        _
    $region6: #{pixel_unshuffle.1} parent=1 // loop_footer
      %s14 = sadd.s32 1, %s10
    $region7: #{pixel_unshuffle.1} parent=1 // loop_footer_branch
      %9 = sbr.rel target = $region3
    $region8: #{pixel_unshuffle.1} parent=1 // loop_exit
      _
    %1069 = vsyncpa [#allocation5], 1
    %s1070 = scalar_lea.sflag [#allocation5], 1
    %1071 = vsyncpa %s1070, 1

</llo_original>
